<compile_context>
chip_gen: v5e
topology: v5e:2x2
jax: 0.10.0
libtpu: 0.0.40
codegen_flags: <defaults>
</compile_context>

<pallas_src>
import math
from functools import partial

import jax
import jax.numpy as jnp
import numpy as np
from jax.experimental import pallas as pl
from jax.experimental.pallas import tpu as pltpu


def _block_kernel(H, dh, Hp, eps, tile_n, tile_k,
                  x_ref, cos_ref, sin_ref,
                  wn1_ref, wn2_ref,
                  wq_ref, bq_ref, wk_ref, bk_ref, wv_ref, bv_ref,
                  wproj_ref, bproj_ref,
                  w12_ref, b12_ref, w3_ref, b3_ref,
                  out_ref,
                  k_scr, v_scr):
    f32, bf16 = jnp.float32, jnp.bfloat16
    N, Dp = x_ref.shape                      # full padded sequence block per batch
    D = H * dh                               # real channel count
    inv_d = 1.0 / D
    t = pl.program_id(1)

    def rmsnorm(v, w):
        ms = jnp.sum(v * v, axis=-1, keepdims=True) * inv_d
        return (v * jax.lax.rsqrt(ms + eps) * w).astype(bf16)

    def rope(v, cos, sin):
        # half-split (NeoX) layout: single roll, rotate_half sign folded into sin
        return v * cos + pltpu.roll(v, shift=dh // 2, axis=2) * sin

    def heads(v2d, rows):
        # (rows, D) -> (H, rows, dh)
        return pltpu.einshape("nhd->hnd", v2d.reshape(rows, H, dh))

    # ---- once per batch step: K/V for the whole sequence into VMEM scratch ----
    @pl.when(t == 0)
    def _():
        xf = x_ref[...].astype(f32)
        hn = rmsnorm(xf, wn1_ref[...])
        kx = jnp.dot(hn, wk_ref[...], preferred_element_type=f32) + bk_ref[...]
        vx = jnp.dot(hn, wv_ref[...], preferred_element_type=f32) + bv_ref[...]
        k = rope(heads(kx, N), cos_ref[...], sin_ref[...])
        k_scr[...] = k.astype(bf16)
        v_scr[...] = heads(vx, N).astype(bf16)

    # ---- query-tile path: RMSNorm1 + Q projection + RoPE ----
    row0 = pl.multiple_of(t * tile_n, tile_n)
    x_t = x_ref[pl.ds(row0, tile_n), :].astype(f32)              # (TN, Dp)
    h1 = rmsnorm(x_t, wn1_ref[...])
    qx = jnp.dot(h1, wq_ref[...], preferred_element_type=f32) + bq_ref[...]
    q = rope(heads(qx, tile_n),
             cos_ref[pl.ds(row0, tile_n), :],
             sin_ref[pl.ds(row0, tile_n), :]).astype(bf16)        # (H, TN, dh)
    # TODO(synk): for tiny dh (e.g. the dh=8 test config) merge heads into wider
    # matmuls / pad dh so the MXU contraction depth and lane packing are not wasted.

    # ---- flash attention over KV tiles (online softmax, f32 m/l/acc) ----
    num_kv = N // tile_k

    def kv_step(j, carry):
        m, l, acc = carry
        c0 = pl.multiple_of(j * tile_k, tile_k)
        kb = k_scr[:, pl.ds(c0, tile_k), :]                       # (H, TK, dh) bf16
        vb = v_scr[:, pl.ds(c0, tile_k), :]
        s = jnp.einsum("hnd,hmd->hnm", q, kb,
                       preferred_element_type=f32)                # (H, TN, TK)
        m_new = jnp.maximum(m, jnp.max(s, axis=-1, keepdims=True))
        alpha = jnp.exp(m - m_new)
        p = jnp.exp(s - m_new)                                    # f32 on all chips
        # TODO(synk): on v6e/v7x (bf16 VPU/EUP) the exp / p operand could be bf16.
        l = alpha * l + jnp.sum(p, axis=-1, keepdims=True)
        acc = alpha * acc + jnp.einsum("hnm,hmd->hnd", p.astype(bf16), vb,
                                       preferred_element_type=f32)
        return m_new, l, acc

    m0 = jnp.full((H, tile_n, 1), -jnp.inf, f32)
    l0 = jnp.zeros((H, tile_n, 1), f32)
    a0 = jnp.zeros((H, tile_n, dh), f32)
    m, l, acc = jax.lax.fori_loop(0, num_kv, kv_step, (m0, l0, a0))
    o = (acc / l).astype(bf16)               # exact softmax normalization (f32 divide)

    # ---- output projection: head-merge transpose fused into H accumulated dots ----
    attn = jnp.zeros((tile_n, Dp), f32)
    for hh in range(H):
        attn = attn + jnp.dot(o[hh], wproj_ref[hh], preferred_element_type=f32)
    attn = attn + bproj_ref[...]
    x_res = x_t + attn

    # ---- RMSNorm 2 + SwiGLU FFN (hidden padded to Hp: lane-aligned x1/x2 split) ----
    h2 = rmsnorm(x_res, wn2_ref[...])
    h12 = jnp.dot(h2, w12_ref[...], preferred_element_type=f32) + b12_ref[...]
    a1 = h12[:, :Hp]
    a2 = h12[:, Hp:]
    g = (a1 * jax.nn.sigmoid(a1) * a2).astype(bf16)
    mlp = jnp.dot(g, w3_ref[...], preferred_element_type=f32) + b3_ref[...]
    out_ref[...] = (x_res + mlp).astype(out_ref.dtype)


def _round_up(v, m):
    return ((v + m - 1) // m) * m


def prepare_block_params(params, rope, num_heads):
    """One-time, kernel-ready weight preprocessing (hoisted out of the hot path).

    Returns (weights_tuple, meta). Call once per model; reuse across forward calls.
    """
    f32, bf16 = jnp.float32, jnp.bfloat16
    wqkv = jnp.asarray(params["wqkv"], f32)
    D = wqkv.shape[0]
    H = num_heads
    assert D % H == 0
    dh = D // H
    assert dh % 2 == 0, "head_dim must be even for rotary embeddings"
    dh2 = dh // 2
    Dp = _round_up(D, 128)                   # lane-dense channel dim
    pc = Dp - D
    hidden = params["w3"].shape[0]
    Hp = _round_up(hidden, 128)
    hp = Hp - hidden

    # RoPE tables -> half-split (NeoX) order; rotate_half sign folded into sin.
    rope = jnp.asarray(rope, f32)
    cos_i, sin_i = rope[:, :dh], rope[:, dh:]
    cos_hs = jnp.concatenate([cos_i[:, 0::2], cos_i[:, 1::2]], axis=-1)
    sin_hs = jnp.concatenate([-sin_i[:, 0::2], sin_i[:, 1::2]], axis=-1)

    # q/k columns -> per-head half-split order (cancels in q@k^T); fold 1/sqrt(dh)
    # into q weight/bias.
    perm_head = np.concatenate([2 * np.arange(dh2), 2 * np.arange(dh2) + 1])
    perm = (np.arange(H)[:, None] * dh + perm_head[None, :]).reshape(-1)
    scale = 1.0 / math.sqrt(dh)
    bqkv = jnp.asarray(params["bqkv"], f32)

    def pad_in(w):                            # zero-pad the input (D) rows to Dp
        return jnp.pad(w, ((0, pc), (0, 0)))

    wq = pad_in(wqkv[:, :D][:, perm] * scale).astype(bf16)
    wk = pad_in(wqkv[:, D:2 * D][:, perm]).astype(bf16)
    wv = pad_in(wqkv[:, 2 * D:]).astype(bf16)
    bq = bqkv[:, :D][:, perm] * scale
    bk = bqkv[:, D:2 * D][:, perm]
    bv = bqkv[:, 2 * D:]

    # Output projection reshaped to (H, dh, Dp): head-merge transpose fuses into
    # H accumulated (TN, dh) x (dh, Dp) MXU dots in the kernel.
    wproj = jnp.pad(jnp.asarray(params["wproj"], f32), ((0, 0), (0, pc)))
    wproj_r = wproj.reshape(H, dh, Dp).astype(bf16)
    bproj = jnp.pad(jnp.asarray(params["bproj"], f32), ((0, 0), (0, pc)))

    wn1 = jnp.pad(jnp.asarray(params["wn1"], f32), ((0, 0), (0, pc)))
    wn2 = jnp.pad(jnp.asarray(params["wn2"], f32), ((0, 0), (0, pc)))

    # FFN: pad each w12 output segment (and b12) to Hp so the x1/x2 split is
    # lane-aligned; pad w3 rows to Hp, cols to Dp (padding is exact: silu(0)*0 = 0).
    w12 = jnp.asarray(params["w12"], f32)
    b12 = jnp.asarray(params["b12"], f32)
    w12_p = jnp.concatenate(
        [jnp.pad(w12[:, :hidden], ((0, pc), (0, hp))),
         jnp.pad(w12[:, hidden:], ((0, pc), (0, hp)))], axis=1).astype(bf16)
    b12_p = jnp.concatenate(
        [jnp.pad(b12[:, :hidden], ((0, 0), (0, hp))),
         jnp.pad(b12[:, hidden:], ((0, 0), (0, hp)))], axis=1)
    w3_p = jnp.pad(jnp.asarray(params["w3"], f32), ((0, hp), (0, pc))).astype(bf16)
    b3_p = jnp.pad(jnp.asarray(params["b3"], f32), ((0, 0), (0, pc)))
    # TODO(synk): on v7x evaluate fp8 (with per-channel scales) for the big matmul
    # weights; bf16 kept here for v5e/v6e compatibility and accuracy.

    weights = (cos_hs, sin_hs, wn1, wn2, wq, bq, wk, bk, wv, bv,
               wproj_r, bproj, w12_p, b12_p, w3_p, b3_p)
    meta = dict(D=D, Dp=Dp, H=H, dh=dh, hidden=hidden, Hp=Hp)
    return weights, meta


def block_forward(x, prepared, eps=1e-6, tile_n=None, tile_k=None):
    """x: (B, N, D) residual stream; prepared = prepare_block_params(...)."""
    weights, meta = prepared
    B, N, D = x.shape
    assert D == meta["D"]
    Dp, H, dh, Hp = meta["Dp"], meta["H"], meta["dh"], meta["Hp"]

    # Sequence (query) tile and KV tile sizes; must divide N and respect (8,128).
    if tile_n is None:
        tile_n = min(N, 256)
    if N % tile_n or tile_n % 8:
        tile_n = N
    if tile_k is None:
        tile_k = min(N, 512)
    if N % tile_k or tile_k % 8:
        tile_k = N
    n_tiles = N // tile_n

    x_p = jnp.pad(x, ((0, 0), (0, 0), (0, Dp - D)))   # lane-dense channels (exact)

    def invariant_spec(a):
        nd = a.ndim
        return pl.BlockSpec(a.shape, lambda b, t, _nd=nd: (0,) * _nd,
                            pipeline_mode=pl.Buffered(1))   # single-buffered weights

    in_specs = [pl.BlockSpec((None, N, Dp), lambda b, t: (b, 0, 0))]  # full seq per b
    in_specs += [invariant_spec(w) for w in weights]
    out_spec = pl.BlockSpec((None, tile_n, Dp), lambda b, t: (b, t, 0))
    # TODO(synk): for very long N, compute K/V in a separate tiled pass so the
    # per-step x block is bounded by tile_n instead of N.

    # Explicit VMEM budget: Buffered(1) weights + double-buffered x/out blocks +
    # bf16 K/V scratch + f32 working set, with ~2x headroom (clamped).
    itemsize = x.dtype.itemsize
    w_bytes = sum(int(w.size) * w.dtype.itemsize for w in weights)
    x_bytes = 2 * N * Dp * itemsize
    o_bytes = 2 * tile_n * Dp * itemsize
    scr_bytes = 2 * H * N * dh * 2
    act_bytes = 4 * (N * Dp + 6 * tile_n * Dp + 2 * H * tile_n * tile_k
                     + 3 * H * N * dh + 2 * tile_n * Hp)
    vmem_limit = int(min(128 * 2**20,
                         max(32 * 2**20,
                             2 * (w_bytes + x_bytes + o_bytes + scr_bytes + act_bytes))))

    # Aliasing x -> out is only airtight when there is a single sequence tile
    # (the full x block is read before any aliased row is written back).
    io_alias = {0: 0} if n_tiles == 1 else {}

    kernel = partial(_block_kernel, H, dh, Hp, eps, tile_n, tile_k)

    out_p = pl.pallas_call(
        kernel,
        out_shape=jax.ShapeDtypeStruct((B, N, Dp), x.dtype),
        grid=(B, n_tiles),
        in_specs=in_specs,
        out_specs=out_spec,
        scratch_shapes=[pltpu.VMEM((H, N, dh), jnp.bfloat16),   # K (post-RoPE)
                        pltpu.VMEM((H, N, dh), jnp.bfloat16)],  # V
        input_output_aliases=io_alias,
        compiler_params=pltpu.CompilerParams(
            dimension_semantics=("parallel", "arbitrary"),
            vmem_limit_bytes=vmem_limit),
    )(x_p, *weights)
    return out_p[:, :, :D]


# ----------------------- pure-JAX reference for validation -----------------------
def block_reference(x, rope, params, num_heads, eps=1e-6):
    B, N, D = x.shape
    dh = D // num_heads

    def rmsnorm(t, w):
        return t * jax.lax.rsqrt(jnp.mean(t * t, -1, keepdims=True) + eps) * w

    def rot_half(t):
        tr = t.reshape(*t.shape[:-1], -1, 2)
        t1, t2 = tr[..., 0], tr[..., 1]
        return jnp.stack([-t2, t1], axis=-1).reshape(t.shape)

    cos = rope[:, :dh][None, None]
    sin = rope[:, dh:][None, None]

    h = rmsnorm(x, params["wn1"][0])
    qkv = h @ params["wqkv"] + params["bqkv"][0]
    qkv = qkv.reshape(B, N, 3, num_heads, dh)
    q = qkv[:, :, 0].transpose(0, 2, 1, 3)
    k = qkv[:, :, 1].transpose(0, 2, 1, 3)
    v = qkv[:, :, 2].transpose(0, 2, 1, 3)
    q = q * cos + rot_half(q) * sin
    k = k * cos + rot_half(k) * sin
    s = jnp.einsum("bhnd,bhmd->bhnm", q, k) / math.sqrt(dh)
    p = jax.nn.softmax(s, axis=-1)
    o = jnp.einsum("bhnm,bhmd->bhnd", p, v)
    o = o.transpose(0, 2, 1, 3).reshape(B, N, D)
    x = x + (o @ params["wproj"] + params["bproj"][0])

    h2 = rmsnorm(x, params["wn2"][0])
    h12 = h2 @ params["w12"] + params["b12"][0]
    hidden = params["w3"].shape[0]
    x1, x2 = h12[..., :hidden], h12[..., hidden:]
    g = jax.nn.silu(x1) * x2
    return x + (g @ params["w3"] + params["b3"][0])


if __name__ == "__main__":
    B, N, D = 2, 8, 48
    num_heads = 6
    dh = D // num_heads
    mlp_ratio = 4.0
    hidden = int(2.0 / 3.0 * D * mlp_ratio)   # 128

    key = jax.random.PRNGKey(0)
    ks = jax.random.split(key, 8)
    x = jax.random.normal(ks[0], (B, N, D), dtype=jnp.float32)

    # rope: (N, 2*head_dim) = [cos | sin], standard interleaved-pair angles
    pos = jnp.arange(N, dtype=jnp.float32)
    inv_freq = 1.0 / (10000.0 ** (jnp.arange(0, dh, 2, dtype=jnp.float32) / dh))
    ang = pos[:, None] * inv_freq[None, :]            # (N, dh/2)
    ang = jnp.repeat(ang, 2, axis=-1)                 # (N, dh)
    rope = jnp.concatenate([jnp.cos(ang), jnp.sin(ang)], axis=-1)   # (N, 2*dh)

    sc = 0.05
    params = {
        "wn1": jnp.ones((1, D), jnp.float32),
        "wn2": jnp.ones((1, D), jnp.float32),
        # pre-transposed to (in, out) so the kernel computes x @ W + b
        "wqkv": sc * jax.random.normal(ks[1], (D, 3 * D), jnp.float32),
        "bqkv": sc * jax.random.normal(ks[2], (1, 3 * D), jnp.float32),
        "wproj": sc * jax.random.normal(ks[3], (D, D), jnp.float32),
        "bproj": sc * jax.random.normal(ks[4], (1, D), jnp.float32),
        "w12": sc * jax.random.normal(ks[5], (D, 2 * hidden), jnp.float32),
        "b12": sc * jax.random.normal(ks[6], (1, 2 * hidden), jnp.float32),
        "w3": sc * jax.random.normal(ks[7], (hidden, D), jnp.float32),
        "b3": jnp.zeros((1, D), jnp.float32),
    }

    prepared = prepare_block_params(params, rope, num_heads)   # one-time, cached
    out = jax.block_until_ready(block_forward(x, prepared, eps=1e-6))
    ref = jax.block_until_ready(block_reference(x, rope, params, num_heads))

    assert out.shape == (B, N, D)
    # bf16 MXU operands (f32 accumulate) dominate the error at this magnitude regime.
    np.testing.assert_allclose(np.asarray(out), np.asarray(ref), rtol=2e-2, atol=2e-2)
    print("KERNEL_OK")
</pallas_src>

<mosaic_0001>
module attributes {stable_mosaic.version = 11 : i64} {
  func.func @_block_kernel(%arg0: i32, %arg1: i32, %arg2: memref<1x8x128xf32, #tpu.memory_space<vmem>>, %arg3: memref<8x8xf32, #tpu.memory_space<vmem>>, %arg4: memref<8x8xf32, #tpu.memory_space<vmem>>, %arg5: memref<1x128xf32, #tpu.memory_space<vmem>>, %arg6: memref<1x128xf32, #tpu.memory_space<vmem>>, %arg7: memref<128x48xbf16, #tpu.memory_space<vmem>>, %arg8: memref<1x48xf32, #tpu.memory_space<vmem>>, %arg9: memref<128x48xbf16, #tpu.memory_space<vmem>>, %arg10: memref<1x48xf32, #tpu.memory_space<vmem>>, %arg11: memref<128x48xbf16, #tpu.memory_space<vmem>>, %arg12: memref<1x48xf32, #tpu.memory_space<vmem>>, %arg13: memref<6x8x128xbf16, #tpu.memory_space<vmem>>, %arg14: memref<1x128xf32, #tpu.memory_space<vmem>>, %arg15: memref<128x256xbf16, #tpu.memory_space<vmem>>, %arg16: memref<1x256xf32, #tpu.memory_space<vmem>>, %arg17: memref<128x128xbf16, #tpu.memory_space<vmem>>, %arg18: memref<1x128xf32, #tpu.memory_space<vmem>>, %arg19: memref<1x8x128xf32, #tpu.memory_space<vmem>>, %arg20: memref<6x8x8xbf16, #tpu.memory_space<vmem>>, %arg21: memref<6x8x8xbf16, #tpu.memory_space<vmem>>) attributes {dimension_semantics = [#tpu.dimension_semantics<parallel>, #tpu.dimension_semantics<arbitrary>], iteration_bounds = array<i64: 2, 1>, scalar_prefetch = 0 : i64, scratch_operands = 2 : i64, tpu.core_type = #tpu.core_type<tc>, window_params = [{transform_indices = @transform_0, window_bounds = array<i64: 1, 8, 128>}, {pipeline_mode = #tpu.pipeline_mode<synchronous>, transform_indices = @transform_1, window_bounds = array<i64: 8, 8>}, {pipeline_mode = #tpu.pipeline_mode<synchronous>, transform_indices = @transform_2, window_bounds = array<i64: 8, 8>}, {pipeline_mode = #tpu.pipeline_mode<synchronous>, transform_indices = @transform_3, window_bounds = array<i64: 1, 128>}, {pipeline_mode = #tpu.pipeline_mode<synchronous>, transform_indices = @transform_4, window_bounds = array<i64: 1, 128>}, {pipeline_mode = #tpu.pipeline_mode<synchronous>, transform_indices = @transform_5, window_bounds = array<i64: 128, 48>}, {pipeline_mode = #tpu.pipeline_mode<synchronous>, transform_indices = @transform_6, window_bounds = array<i64: 1, 48>}, {pipeline_mode = #tpu.pipeline_mode<synchronous>, transform_indices = @transform_7, window_bounds = array<i64: 128, 48>}, {pipeline_mode = #tpu.pipeline_mode<synchronous>, transform_indices = @transform_8, window_bounds = array<i64: 1, 48>}, {pipeline_mode = #tpu.pipeline_mode<synchronous>, transform_indices = @transform_9, window_bounds = array<i64: 128, 48>}, {pipeline_mode = #tpu.pipeline_mode<synchronous>, transform_indices = @transform_10, window_bounds = array<i64: 1, 48>}, {pipeline_mode = #tpu.pipeline_mode<synchronous>, transform_indices = @transform_11, window_bounds = array<i64: 6, 8, 128>}, {pipeline_mode = #tpu.pipeline_mode<synchronous>, transform_indices = @transform_12, window_bounds = array<i64: 1, 128>}, {pipeline_mode = #tpu.pipeline_mode<synchronous>, transform_indices = @transform_13, window_bounds = array<i64: 128, 256>}, {pipeline_mode = #tpu.pipeline_mode<synchronous>, transform_indices = @transform_14, window_bounds = array<i64: 1, 256>}, {pipeline_mode = #tpu.pipeline_mode<synchronous>, transform_indices = @transform_15, window_bounds = array<i64: 128, 128>}, {pipeline_mode = #tpu.pipeline_mode<synchronous>, transform_indices = @transform_16, window_bounds = array<i64: 1, 128>}, {transform_indices = @transform_17, window_bounds = array<i64: 1, 8, 128>}]} {
    %c0_i32 = arith.constant 0 : i32
    %0 = arith.cmpi eq, %arg1, %c0_i32 : i32
    %1 = arith.extui %0 : i1 to i32
    %c0_i32_0 = arith.constant 0 : i32
    %2 = arith.cmpi ne, %1, %c0_i32_0 : i32
    scf.if %2 {
      %c0_67 = arith.constant 0 : index
      %c0_68 = arith.constant 0 : index
      %c0_69 = arith.constant 0 : index
      %151 = vector.load %arg2[%c0_67, %c0_68, %c0_69] : memref<1x8x128xf32, #tpu.memory_space<vmem>>, vector<1x8x128xf32>
      %152 = vector.shape_cast %151 : vector<1x8x128xf32> to vector<8x128xf32>
      %c0_70 = arith.constant 0 : index
      %c0_71 = arith.constant 0 : index
      %153 = vector.load %arg5[%c0_70, %c0_71] : memref<1x128xf32, #tpu.memory_space<vmem>>, vector<1x128xf32>
      %154 = arith.mulf %152, %152 : vector<8x128xf32>
      %cst_72 = arith.constant dense<0.000000e+00> : vector<8xf32>
      %155 = vector.multi_reduction <add>, %154, %cst_72 [1] : vector<8x128xf32> to vector<8xf32>
      %156 = vector.shape_cast %155 : vector<8xf32> to vector<8x1xf32>
      %cst_73 = arith.constant 0.020833334 : f32
      %157 = vector.broadcast %cst_73 : f32 to vector<8x1xf32>
      %158 = arith.mulf %156, %157 : vector<8x1xf32>
      %cst_74 = arith.constant 9.99999997E-7 : f32
      %159 = vector.broadcast %cst_74 : f32 to vector<8x1xf32>
      %160 = arith.addf %158, %159 : vector<8x1xf32>
      %161 = math.rsqrt %160 : vector<8x1xf32>
      %162 = vector.broadcast %161 : vector<8x1xf32> to vector<8x128xf32>
      %163 = arith.mulf %152, %162 : vector<8x128xf32>
      %164 = vector.broadcast %153 : vector<1x128xf32> to vector<8x128xf32>
      %165 = arith.mulf %163, %164 : vector<8x128xf32>
      %166 = arith.truncf %165 : vector<8x128xf32> to vector<8x128xbf16>
      %c0_75 = arith.constant 0 : index
      %c0_76 = arith.constant 0 : index
      %167 = vector.load %arg9[%c0_75, %c0_76] : memref<128x48xbf16, #tpu.memory_space<vmem>>, vector<128x48xbf16>
      %cst_77 = arith.constant dense<0.000000e+00> : vector<8x48xf32>
      %168 = tpu.matmul %166, %167, %cst_77 {dimension_numbers = #tpu.dot_dimension_numbers<[1], [0], [0], [1], [0, 0, 1, 1], [], []>} : vector<8x128xbf16>, vector<128x48xbf16>, vector<8x48xf32> -> vector<8x48xf32>
      %c0_78 = arith.constant 0 : index
      %c0_79 = arith.constant 0 : index
      %169 = vector.load %arg10[%c0_78, %c0_79] : memref<1x48xf32, #tpu.memory_space<vmem>>, vector<1x48xf32>
      %170 = vector.broadcast %169 : vector<1x48xf32> to vector<8x48xf32>
      %171 = arith.addf %168, %170 : vector<8x48xf32>
      %c0_80 = arith.constant 0 : index
      %c0_81 = arith.constant 0 : index
      %172 = vector.load %arg11[%c0_80, %c0_81] : memref<128x48xbf16, #tpu.memory_space<vmem>>, vector<128x48xbf16>
      %cst_82 = arith.constant dense<0.000000e+00> : vector<8x48xf32>
      %173 = tpu.matmul %166, %172, %cst_82 {dimension_numbers = #tpu.dot_dimension_numbers<[1], [0], [0], [1], [0, 0, 1, 1], [], []>} : vector<8x128xbf16>, vector<128x48xbf16>, vector<8x48xf32> -> vector<8x48xf32>
      %c0_83 = arith.constant 0 : index
      %c0_84 = arith.constant 0 : index
      %174 = vector.load %arg12[%c0_83, %c0_84] : memref<1x48xf32, #tpu.memory_space<vmem>>, vector<1x48xf32>
      %175 = vector.broadcast %174 : vector<1x48xf32> to vector<8x48xf32>
      %176 = arith.addf %173, %175 : vector<8x48xf32>
      %177 = vector.shape_cast %171 : vector<8x48xf32> to vector<8x6x8xf32>
      %178 = tpu.transpose %177, [1, 0, 2] : vector<8x6x8xf32> -> vector<6x8x8xf32>
      %c0_85 = arith.constant 0 : index
      %c0_86 = arith.constant 0 : index
      %179 = vector.load %arg3[%c0_85, %c0_86] : memref<8x8xf32, #tpu.memory_space<vmem>>, vector<8x8xf32>
      %c0_87 = arith.constant 0 : index
      %c0_88 = arith.constant 0 : index
      %180 = vector.load %arg4[%c0_87, %c0_88] : memref<8x8xf32, #tpu.memory_space<vmem>>, vector<8x8xf32>
      %181 = vector.shape_cast %179 : vector<8x8xf32> to vector<1x8x8xf32>
      %182 = vector.broadcast %181 : vector<1x8x8xf32> to vector<6x8x8xf32>
      %183 = arith.mulf %178, %182 : vector<6x8x8xf32>
      %c4_i32_89 = arith.constant 4 : i32
      %184 = tpu.dynamic_rotate %178 by %c4_i32_89 dim 2 : vector<6x8x8xf32>, i32 -> vector<6x8x8xf32>
      %185 = vector.shape_cast %180 : vector<8x8xf32> to vector<1x8x8xf32>
      %186 = vector.broadcast %185 : vector<1x8x8xf32> to vector<6x8x8xf32>
      %187 = arith.mulf %184, %186 : vector<6x8x8xf32>
      %188 = arith.addf %183, %187 : vector<6x8x8xf32>
      %189 = arith.truncf %188 : vector<6x8x8xf32> to vector<6x8x8xbf16>
      %c0_90 = arith.constant 0 : index
      %c0_91 = arith.constant 0 : index
      %c0_92 = arith.constant 0 : index
      %190 = vector.load %arg20[%c0_90, %c0_91, %c0_92] : memref<6x8x8xbf16, #tpu.memory_space<vmem>>, vector<6x8x8xbf16>
      tpu.vector_store %arg20[%c0_90, %c0_91, %c0_92], %189 {strides = array<i32>} : memref<6x8x8xbf16, #tpu.memory_space<vmem>>, vector<6x8x8xbf16>,
      %191 = vector.shape_cast %176 : vector<8x48xf32> to vector<8x6x8xf32>
      %192 = tpu.transpose %191, [1, 0, 2] : vector<8x6x8xf32> -> vector<6x8x8xf32>
      %193 = arith.truncf %192 : vector<6x8x8xf32> to vector<6x8x8xbf16>
      %c0_93 = arith.constant 0 : index
      %c0_94 = arith.constant 0 : index
      %c0_95 = arith.constant 0 : index
      %194 = vector.load %arg21[%c0_93, %c0_94, %c0_95] : memref<6x8x8xbf16, #tpu.memory_space<vmem>>, vector<6x8x8xbf16>
      tpu.vector_store %arg21[%c0_93, %c0_94, %c0_95], %193 {strides = array<i32>} : memref<6x8x8xbf16, #tpu.memory_space<vmem>>, vector<6x8x8xbf16>,
    } else {
    }
    %c8_i32 = arith.constant 8 : i32
    %3 = arith.muli %arg1, %c8_i32 : i32
    %4 = tpu.assume_multiple %3, 8 : i32
    %c0 = arith.constant 0 : index
    %5 = arith.index_cast %4 : i32 to index
    %c0_1 = arith.constant 0 : index
    %6 = vector.load %arg2[%c0, %5, %c0_1] : memref<1x8x128xf32, #tpu.memory_space<vmem>>, vector<1x8x128xf32>
    %7 = vector.shape_cast %6 : vector<1x8x128xf32> to vector<8x128xf32>
    %c0_2 = arith.constant 0 : index
    %c0_3 = arith.constant 0 : index
    %8 = vector.load %arg5[%c0_2, %c0_3] : memref<1x128xf32, #tpu.memory_space<vmem>>, vector<1x128xf32>
    %9 = arith.mulf %7, %7 : vector<8x128xf32>
    %cst = arith.constant dense<0.000000e+00> : vector<8xf32>
    %10 = vector.multi_reduction <add>, %9, %cst [1] : vector<8x128xf32> to vector<8xf32>
    %11 = vector.shape_cast %10 : vector<8xf32> to vector<8x1xf32>
    %cst_4 = arith.constant 0.020833334 : f32
    %12 = vector.broadcast %cst_4 : f32 to vector<8x1xf32>
    %13 = arith.mulf %11, %12 : vector<8x1xf32>
    %cst_5 = arith.constant 9.99999997E-7 : f32
    %14 = vector.broadcast %cst_5 : f32 to vector<8x1xf32>
    %15 = arith.addf %13, %14 : vector<8x1xf32>
    %16 = math.rsqrt %15 : vector<8x1xf32>
    %17 = vector.broadcast %16 : vector<8x1xf32> to vector<8x128xf32>
    %18 = arith.mulf %7, %17 : vector<8x128xf32>
    %19 = vector.broadcast %8 : vector<1x128xf32> to vector<8x128xf32>
    %20 = arith.mulf %18, %19 : vector<8x128xf32>
    %21 = arith.truncf %20 : vector<8x128xf32> to vector<8x128xbf16>
    %c0_6 = arith.constant 0 : index
    %c0_7 = arith.constant 0 : index
    %22 = vector.load %arg7[%c0_6, %c0_7] : memref<128x48xbf16, #tpu.memory_space<vmem>>, vector<128x48xbf16>
    %cst_8 = arith.constant dense<0.000000e+00> : vector<8x48xf32>
    %23 = tpu.matmul %21, %22, %cst_8 {dimension_numbers = #tpu.dot_dimension_numbers<[1], [0], [0], [1], [0, 0, 1, 1], [], []>} : vector<8x128xbf16>, vector<128x48xbf16>, vector<8x48xf32> -> vector<8x48xf32>
    %c0_9 = arith.constant 0 : index
    %c0_10 = arith.constant 0 : index
    %24 = vector.load %arg8[%c0_9, %c0_10] : memref<1x48xf32, #tpu.memory_space<vmem>>, vector<1x48xf32>
    %25 = vector.broadcast %24 : vector<1x48xf32> to vector<8x48xf32>
    %26 = arith.addf %23, %25 : vector<8x48xf32>
    %27 = vector.shape_cast %26 : vector<8x48xf32> to vector<8x6x8xf32>
    %28 = tpu.transpose %27, [1, 0, 2] : vector<8x6x8xf32> -> vector<6x8x8xf32>
    %29 = arith.index_cast %4 : i32 to index
    %c0_11 = arith.constant 0 : index
    %30 = vector.load %arg3[%29, %c0_11] : memref<8x8xf32, #tpu.memory_space<vmem>>, vector<8x8xf32>
    %31 = arith.index_cast %4 : i32 to index
    %c0_12 = arith.constant 0 : index
    %32 = vector.load %arg4[%31, %c0_12] : memref<8x8xf32, #tpu.memory_space<vmem>>, vector<8x8xf32>
    %33 = vector.shape_cast %30 : vector<8x8xf32> to vector<1x8x8xf32>
    %34 = vector.broadcast %33 : vector<1x8x8xf32> to vector<6x8x8xf32>
    %35 = arith.mulf %28, %34 : vector<6x8x8xf32>
    %c4_i32 = arith.constant 4 : i32
    %36 = tpu.dynamic_rotate %28 by %c4_i32 dim 2 : vector<6x8x8xf32>, i32 -> vector<6x8x8xf32>
    %37 = vector.shape_cast %32 : vector<8x8xf32> to vector<1x8x8xf32>
    %38 = vector.broadcast %37 : vector<1x8x8xf32> to vector<6x8x8xf32>
    %39 = arith.mulf %36, %38 : vector<6x8x8xf32>
    %40 = arith.addf %35, %39 : vector<6x8x8xf32>
    %41 = arith.truncf %40 : vector<6x8x8xf32> to vector<6x8x8xbf16>
    %cst_13 = arith.constant 0xFF800000 : f32
    %42 = vector.broadcast %cst_13 : f32 to vector<6x8x1xf32>
    %cst_14 = arith.constant 0.000000e+00 : f32
    %43 = vector.broadcast %cst_14 : f32 to vector<6x8x1xf32>
    %cst_15 = arith.constant 0.000000e+00 : f32
    %44 = vector.broadcast %cst_15 : f32 to vector<6x8x8xf32>
    %c0_i32_16 = arith.constant 0 : i32
    %c8_i32_17 = arith.constant 8 : i32
    %45 = arith.muli %c0_i32_16, %c8_i32_17 : i32
    %46 = tpu.assume_multiple %45, 8 : i32
    %c0_18 = arith.constant 0 : index
    %47 = arith.index_cast %46 : i32 to index
    %c0_19 = arith.constant 0 : index
    %48 = vector.load %arg20[%c0_18, %47, %c0_19] : memref<6x8x8xbf16, #tpu.memory_space<vmem>>, vector<6x8x8xbf16>
    %c0_20 = arith.constant 0 : index
    %49 = arith.index_cast %46 : i32 to index
    %c0_21 = arith.constant 0 : index
    %50 = vector.load %arg21[%c0_20, %49, %c0_21] : memref<6x8x8xbf16, #tpu.memory_space<vmem>>, vector<6x8x8xbf16>
    "tpu.trace_start"() <{level = 10 : i32, message = "hnd,hmd->hnm"}> : () -> ()
    %cst_22 = arith.constant dense<0.000000e+00> : vector<6x8x8xf32>
    %51 = tpu.matmul %41, %48, %cst_22 {dimension_numbers = #tpu.dot_dimension_numbers<[2], [2], [1], [1], [0, 0, 0, 1, 1, 1], [0], [0]>} : vector<6x8x8xbf16>, vector<6x8x8xbf16>, vector<6x8x8xf32> -> vector<6x8x8xf32>
    "tpu.trace_stop"() : () -> ()
    %cst_23 = arith.constant dense<0xFF800000> : vector<6x8xf32>
    %52 = vector.multi_reduction <maximumf>, %51, %cst_23 [2] : vector<6x8x8xf32> to vector<6x8xf32>
    %53 = vector.shape_cast %52 : vector<6x8xf32> to vector<6x8x1xf32>
    %54 = arith.maximumf %42, %53 : vector<6x8x1xf32>
    %55 = arith.subf %42, %54 : vector<6x8x1xf32>
    %56 = math.exp %55 : vector<6x8x1xf32>
    %57 = vector.broadcast %54 : vector<6x8x1xf32> to vector<6x8x8xf32>
    %58 = arith.subf %51, %57 : vector<6x8x8xf32>
    %59 = math.exp %58 : vector<6x8x8xf32>
    %60 = arith.mulf %56, %43 : vector<6x8x1xf32>
    %cst_24 = arith.constant dense<0.000000e+00> : vector<6x8xf32>
    %61 = vector.multi_reduction <add>, %59, %cst_24 [2] : vector<6x8x8xf32> to vector<6x8xf32>
    %62 = vector.shape_cast %61 : vector<6x8xf32> to vector<6x8x1xf32>
    %63 = arith.addf %60, %62 : vector<6x8x1xf32>
    %64 = vector.broadcast %56 : vector<6x8x1xf32> to vector<6x8x8xf32>
    %65 = arith.mulf %64, %44 : vector<6x8x8xf32>
    %66 = arith.truncf %59 : vector<6x8x8xf32> to vector<6x8x8xbf16>
    "tpu.trace_start"() <{level = 10 : i32, message = "hnm,hmd->hnd"}> : () -> ()
    %cst_25 = arith.constant dense<0.000000e+00> : vector<6x8x8xf32>
    %67 = tpu.matmul %66, %50, %cst_25 {dimension_numbers = #tpu.dot_dimension_numbers<[2], [1], [1], [2], [0, 0, 0, 1, 1, 2], [0], [0]>} : vector<6x8x8xbf16>, vector<6x8x8xbf16>, vector<6x8x8xf32> -> vector<6x8x8xf32>
    "tpu.trace_stop"() : () -> ()
    %68 = arith.addf %65, %67 : vector<6x8x8xf32>
    %c1_i32 = arith.constant 1 : i32
    %69 = vector.broadcast %63 : vector<6x8x1xf32> to vector<6x8x8xf32>
    %70 = arith.divf %68, %69 : vector<6x8x8xf32>
    %71 = arith.truncf %70 : vector<6x8x8xf32> to vector<6x8x8xbf16>
    %cst_26 = arith.constant 0.000000e+00 : f32
    %72 = vector.broadcast %cst_26 : f32 to vector<8x128xf32>
    %73 = vector.extract_strided_slice %71 {offsets = [0, 0, 0], sizes = [1, 8, 8], strides = [1, 1, 1]} : vector<6x8x8xbf16> to vector<1x8x8xbf16>
    %74 = vector.shape_cast %73 : vector<1x8x8xbf16> to vector<8x8xbf16>
    %c0_27 = arith.constant 0 : index
    %c0_28 = arith.constant 0 : index
    %c0_29 = arith.constant 0 : index
    %75 = vector.load %arg13[%c0_27, %c0_28, %c0_29] : memref<6x8x128xbf16, #tpu.memory_space<vmem>>, vector<1x8x128xbf16>
    %76 = vector.shape_cast %75 : vector<1x8x128xbf16> to vector<8x128xbf16>
    %cst_30 = arith.constant dense<0.000000e+00> : vector<8x128xf32>
    %77 = tpu.matmul %74, %76, %cst_30 {dimension_numbers = #tpu.dot_dimension_numbers<[1], [0], [0], [1], [0, 0, 1, 1], [], []>} : vector<8x8xbf16>, vector<8x128xbf16>, vector<8x128xf32> -> vector<8x128xf32>
    %78 = arith.addf %72, %77 : vector<8x128xf32>
    %79 = vector.extract_strided_slice %71 {offsets = [1, 0, 0], sizes = [1, 8, 8], strides = [1, 1, 1]} : vector<6x8x8xbf16> to vector<1x8x8xbf16>
    %80 = vector.shape_cast %79 : vector<1x8x8xbf16> to vector<8x8xbf16>
    %c1 = arith.constant 1 : index
    %c0_31 = arith.constant 0 : index
    %c0_32 = arith.constant 0 : index
    %81 = vector.load %arg13[%c1, %c0_31, %c0_32] : memref<6x8x128xbf16, #tpu.memory_space<vmem>>, vector<1x8x128xbf16>
    %82 = vector.shape_cast %81 : vector<1x8x128xbf16> to vector<8x128xbf16>
    %cst_33 = arith.constant dense<0.000000e+00> : vector<8x128xf32>
    %83 = tpu.matmul %80, %82, %cst_33 {dimension_numbers = #tpu.dot_dimension_numbers<[1], [0], [0], [1], [0, 0, 1, 1], [], []>} : vector<8x8xbf16>, vector<8x128xbf16>, vector<8x128xf32> -> vector<8x128xf32>
    %84 = arith.addf %78, %83 : vector<8x128xf32>
    %85 = vector.extract_strided_slice %71 {offsets = [2, 0, 0], sizes = [1, 8, 8], strides = [1, 1, 1]} : vector<6x8x8xbf16> to vector<1x8x8xbf16>
    %86 = vector.shape_cast %85 : vector<1x8x8xbf16> to vector<8x8xbf16>
    %c2 = arith.constant 2 : index
    %c0_34 = arith.constant 0 : index
    %c0_35 = arith.constant 0 : index
    %87 = vector.load %arg13[%c2, %c0_34, %c0_35] : memref<6x8x128xbf16, #tpu.memory_space<vmem>>, vector<1x8x128xbf16>
    %88 = vector.shape_cast %87 : vector<1x8x128xbf16> to vector<8x128xbf16>
    %cst_36 = arith.constant dense<0.000000e+00> : vector<8x128xf32>
    %89 = tpu.matmul %86, %88, %cst_36 {dimension_numbers = #tpu.dot_dimension_numbers<[1], [0], [0], [1], [0, 0, 1, 1], [], []>} : vector<8x8xbf16>, vector<8x128xbf16>, vector<8x128xf32> -> vector<8x128xf32>
    %90 = arith.addf %84, %89 : vector<8x128xf32>
    %91 = vector.extract_strided_slice %71 {offsets = [3, 0, 0], sizes = [1, 8, 8], strides = [1, 1, 1]} : vector<6x8x8xbf16> to vector<1x8x8xbf16>
    %92 = vector.shape_cast %91 : vector<1x8x8xbf16> to vector<8x8xbf16>
    %c3 = arith.constant 3 : index
    %c0_37 = arith.constant 0 : index
    %c0_38 = arith.constant 0 : index
    %93 = vector.load %arg13[%c3, %c0_37, %c0_38] : memref<6x8x128xbf16, #tpu.memory_space<vmem>>, vector<1x8x128xbf16>
    %94 = vector.shape_cast %93 : vector<1x8x128xbf16> to vector<8x128xbf16>
    %cst_39 = arith.constant dense<0.000000e+00> : vector<8x128xf32>
    %95 = tpu.matmul %92, %94, %cst_39 {dimension_numbers = #tpu.dot_dimension_numbers<[1], [0], [0], [1], [0, 0, 1, 1], [], []>} : vector<8x8xbf16>, vector<8x128xbf16>, vector<8x128xf32> -> vector<8x128xf32>
    %96 = arith.addf %90, %95 : vector<8x128xf32>
    %97 = vector.extract_strided_slice %71 {offsets = [4, 0, 0], sizes = [1, 8, 8], strides = [1, 1, 1]} : vector<6x8x8xbf16> to vector<1x8x8xbf16>
    %98 = vector.shape_cast %97 : vector<1x8x8xbf16> to vector<8x8xbf16>
    %c4 = arith.constant 4 : index
    %c0_40 = arith.constant 0 : index
    %c0_41 = arith.constant 0 : index
    %99 = vector.load %arg13[%c4, %c0_40, %c0_41] : memref<6x8x128xbf16, #tpu.memory_space<vmem>>, vector<1x8x128xbf16>
    %100 = vector.shape_cast %99 : vector<1x8x128xbf16> to vector<8x128xbf16>
    %cst_42 = arith.constant dense<0.000000e+00> : vector<8x128xf32>
    %101 = tpu.matmul %98, %100, %cst_42 {dimension_numbers = #tpu.dot_dimension_numbers<[1], [0], [0], [1], [0, 0, 1, 1], [], []>} : vector<8x8xbf16>, vector<8x128xbf16>, vector<8x128xf32> -> vector<8x128xf32>
    %102 = arith.addf %96, %101 : vector<8x128xf32>
    %103 = vector.extract_strided_slice %71 {offsets = [5, 0, 0], sizes = [1, 8, 8], strides = [1, 1, 1]} : vector<6x8x8xbf16> to vector<1x8x8xbf16>
    %104 = vector.shape_cast %103 : vector<1x8x8xbf16> to vector<8x8xbf16>
    %c5 = arith.constant 5 : index
    %c0_43 = arith.constant 0 : index
    %c0_44 = arith.constant 0 : index
    %105 = vector.load %arg13[%c5, %c0_43, %c0_44] : memref<6x8x128xbf16, #tpu.memory_space<vmem>>, vector<1x8x128xbf16>
    %106 = vector.shape_cast %105 : vector<1x8x128xbf16> to vector<8x128xbf16>
    %cst_45 = arith.constant dense<0.000000e+00> : vector<8x128xf32>
    %107 = tpu.matmul %104, %106, %cst_45 {dimension_numbers = #tpu.dot_dimension_numbers<[1], [0], [0], [1], [0, 0, 1, 1], [], []>} : vector<8x8xbf16>, vector<8x128xbf16>, vector<8x128xf32> -> vector<8x128xf32>
    %108 = arith.addf %102, %107 : vector<8x128xf32>
    %c0_46 = arith.constant 0 : index
    %c0_47 = arith.constant 0 : index
    %109 = vector.load %arg14[%c0_46, %c0_47] : memref<1x128xf32, #tpu.memory_space<vmem>>, vector<1x128xf32>
    %110 = vector.broadcast %109 : vector<1x128xf32> to vector<8x128xf32>
    %111 = arith.addf %108, %110 : vector<8x128xf32>
    %112 = arith.addf %7, %111 : vector<8x128xf32>
    %c0_48 = arith.constant 0 : index
    %c0_49 = arith.constant 0 : index
    %113 = vector.load %arg6[%c0_48, %c0_49] : memref<1x128xf32, #tpu.memory_space<vmem>>, vector<1x128xf32>
    %114 = arith.mulf %112, %112 : vector<8x128xf32>
    %cst_50 = arith.constant dense<0.000000e+00> : vector<8xf32>
    %115 = vector.multi_reduction <add>, %114, %cst_50 [1] : vector<8x128xf32> to vector<8xf32>
    %116 = vector.shape_cast %115 : vector<8xf32> to vector<8x1xf32>
    %cst_51 = arith.constant 0.020833334 : f32
    %117 = vector.broadcast %cst_51 : f32 to vector<8x1xf32>
    %118 = arith.mulf %116, %117 : vector<8x1xf32>
    %cst_52 = arith.constant 9.99999997E-7 : f32
    %119 = vector.broadcast %cst_52 : f32 to vector<8x1xf32>
    %120 = arith.addf %118, %119 : vector<8x1xf32>
    %121 = math.rsqrt %120 : vector<8x1xf32>
    %122 = vector.broadcast %121 : vector<8x1xf32> to vector<8x128xf32>
    %123 = arith.mulf %112, %122 : vector<8x128xf32>
    %124 = vector.broadcast %113 : vector<1x128xf32> to vector<8x128xf32>
    %125 = arith.mulf %123, %124 : vector<8x128xf32>
    %126 = arith.truncf %125 : vector<8x128xf32> to vector<8x128xbf16>
    %c0_53 = arith.constant 0 : index
    %c0_54 = arith.constant 0 : index
    %127 = vector.load %arg15[%c0_53, %c0_54] : memref<128x256xbf16, #tpu.memory_space<vmem>>, vector<128x256xbf16>
    %cst_55 = arith.constant dense<0.000000e+00> : vector<8x256xf32>
    %128 = tpu.matmul %126, %127, %cst_55 {dimension_numbers = #tpu.dot_dimension_numbers<[1], [0], [0], [1], [0, 0, 1, 1], [], []>} : vector<8x128xbf16>, vector<128x256xbf16>, vector<8x256xf32> -> vector<8x256xf32>
    %c0_56 = arith.constant 0 : index
    %c0_57 = arith.constant 0 : index
    %129 = vector.load %arg16[%c0_56, %c0_57] : memref<1x256xf32, #tpu.memory_space<vmem>>, vector<1x256xf32>
    %130 = vector.broadcast %129 : vector<1x256xf32> to vector<8x256xf32>
    %131 = arith.addf %128, %130 : vector<8x256xf32>
    %132 = vector.extract_strided_slice %131 {offsets = [0, 0], sizes = [8, 128], strides = [1, 1]} : vector<8x256xf32> to vector<8x128xf32>
    %133 = vector.extract_strided_slice %131 {offsets = [0, 128], sizes = [8, 128], strides = [1, 1]} : vector<8x256xf32> to vector<8x128xf32>
    %134 = arith.negf %132 : vector<8x128xf32>
    %135 = math.exp %134 : vector<8x128xf32>
    %cst_58 = arith.constant 1.000000e+00 : f32
    %136 = vector.broadcast %cst_58 : f32 to vector<8x128xf32>
    %137 = arith.addf %136, %135 : vector<8x128xf32>
    %138 = arith.divf %136, %137 : vector<8x128xf32>
    %139 = arith.mulf %132, %138 : vector<8x128xf32>
    %140 = arith.mulf %139, %133 : vector<8x128xf32>
    %141 = arith.truncf %140 : vector<8x128xf32> to vector<8x128xbf16>
    %c0_59 = arith.constant 0 : index
    %c0_60 = arith.constant 0 : index
    %142 = vector.load %arg17[%c0_59, %c0_60] : memref<128x128xbf16, #tpu.memory_space<vmem>>, vector<128x128xbf16>
    %cst_61 = arith.constant dense<0.000000e+00> : vector<8x128xf32>
    %143 = tpu.matmul %141, %142, %cst_61 {dimension_numbers = #tpu.dot_dimension_numbers<[1], [0], [0], [1], [0, 0, 1, 1], [], []>} : vector<8x128xbf16>, vector<128x128xbf16>, vector<8x128xf32> -> vector<8x128xf32>
    %c0_62 = arith.constant 0 : index
    %c0_63 = arith.constant 0 : index
    %144 = vector.load %arg18[%c0_62, %c0_63] : memref<1x128xf32, #tpu.memory_space<vmem>>, vector<1x128xf32>
    %145 = vector.broadcast %144 : vector<1x128xf32> to vector<8x128xf32>
    %146 = arith.addf %143, %145 : vector<8x128xf32>
    %147 = arith.addf %112, %146 : vector<8x128xf32>
    %c0_64 = arith.constant 0 : index
    %c0_65 = arith.constant 0 : index
    %c0_66 = arith.constant 0 : index
    %148 = vector.load %arg19[%c0_64, %c0_65, %c0_66] : memref<1x8x128xf32, #tpu.memory_space<vmem>>, vector<1x8x128xf32>
    %149 = vector.shape_cast %148 : vector<1x8x128xf32> to vector<8x128xf32>
    %150 = vector.shape_cast %147 : vector<8x128xf32> to vector<1x8x128xf32>
    tpu.vector_store %arg19[%c0_64, %c0_65, %c0_66], %150 {strides = array<i32>} : memref<1x8x128xf32, #tpu.memory_space<vmem>>, vector<1x8x128xf32>,
    return
  }
  func.func @transform_0(%arg0: i32, %arg1: i32) -> (i32, i32, i32) {
    %c0_i32 = arith.constant 0 : i32
    %c0_i32_0 = arith.constant 0 : i32
    %c0_i32_1 = arith.constant 0 : i32
    return %arg0, %c0_i32, %c0_i32_0 : i32, i32, i32
  }
  func.func @transform_1(%arg0: i32, %arg1: i32) -> (i32, i32) {
    %c0_i32 = arith.constant 0 : i32
    %c0_i32_0 = arith.constant 0 : i32
    %c0_i32_1 = arith.constant 0 : i32
    return %c0_i32, %c0_i32_0 : i32, i32
  }
  func.func @transform_2(%arg0: i32, %arg1: i32) -> (i32, i32) {
    %c0_i32 = arith.constant 0 : i32
    %c0_i32_0 = arith.constant 0 : i32
    %c0_i32_1 = arith.constant 0 : i32
    return %c0_i32, %c0_i32_0 : i32, i32
  }
  func.func @transform_3(%arg0: i32, %arg1: i32) -> (i32, i32) {
    %c0_i32 = arith.constant 0 : i32
    %c0_i32_0 = arith.constant 0 : i32
    %c0_i32_1 = arith.constant 0 : i32
    return %c0_i32, %c0_i32_0 : i32, i32
  }
  func.func @transform_4(%arg0: i32, %arg1: i32) -> (i32, i32) {
    %c0_i32 = arith.constant 0 : i32
    %c0_i32_0 = arith.constant 0 : i32
    %c0_i32_1 = arith.constant 0 : i32
    return %c0_i32, %c0_i32_0 : i32, i32
  }
  func.func @transform_5(%arg0: i32, %arg1: i32) -> (i32, i32) {
    %c0_i32 = arith.constant 0 : i32
    %c0_i32_0 = arith.constant 0 : i32
    %c0_i32_1 = arith.constant 0 : i32
    return %c0_i32, %c0_i32_0 : i32, i32
  }
  func.func @transform_6(%arg0: i32, %arg1: i32) -> (i32, i32) {
    %c0_i32 = arith.constant 0 : i32
    %c0_i32_0 = arith.constant 0 : i32
    %c0_i32_1 = arith.constant 0 : i32
    return %c0_i32, %c0_i32_0 : i32, i32
  }
  func.func @transform_7(%arg0: i32, %arg1: i32) -> (i32, i32) {
    %c0_i32 = arith.constant 0 : i32
    %c0_i32_0 = arith.constant 0 : i32
    %c0_i32_1 = arith.constant 0 : i32
    return %c0_i32, %c0_i32_0 : i32, i32
  }
  func.func @transform_8(%arg0: i32, %arg1: i32) -> (i32, i32) {
    %c0_i32 = arith.constant 0 : i32
    %c0_i32_0 = arith.constant 0 : i32
    %c0_i32_1 = arith.constant 0 : i32
    return %c0_i32, %c0_i32_0 : i32, i32
  }
  func.func @transform_9(%arg0: i32, %arg1: i32) -> (i32, i32) {
    %c0_i32 = arith.constant 0 : i32
    %c0_i32_0 = arith.constant 0 : i32
    %c0_i32_1 = arith.constant 0 : i32
    return %c0_i32, %c0_i32_0 : i32, i32
  }
  func.func @transform_10(%arg0: i32, %arg1: i32) -> (i32, i32) {
    %c0_i32 = arith.constant 0 : i32
    %c0_i32_0 = arith.constant 0 : i32
    %c0_i32_1 = arith.constant 0 : i32
    return %c0_i32, %c0_i32_0 : i32, i32
  }
  func.func @transform_11(%arg0: i32, %arg1: i32) -> (i32, i32, i32) {
    %c0_i32 = arith.constant 0 : i32
    %c0_i32_0 = arith.constant 0 : i32
    %c0_i32_1 = arith.constant 0 : i32
    %c0_i32_2 = arith.constant 0 : i32
    return %c0_i32, %c0_i32_0, %c0_i32_1 : i32, i32, i32
  }
  func.func @transform_12(%arg0: i32, %arg1: i32) -> (i32, i32) {
    %c0_i32 = arith.constant 0 : i32
    %c0_i32_0 = arith.constant 0 : i32
    %c0_i32_1 = arith.constant 0 : i32
    return %c0_i32, %c0_i32_0 : i32, i32
  }
  func.func @transform_13(%arg0: i32, %arg1: i32) -> (i32, i32) {
    %c0_i32 = arith.constant 0 : i32
    %c0_i32_0 = arith.constant 0 : i32
    %c0_i32_1 = arith.constant 0 : i32
    return %c0_i32, %c0_i32_0 : i32, i32
  }
  func.func @transform_14(%arg0: i32, %arg1: i32) -> (i32, i32) {
    %c0_i32 = arith.constant 0 : i32
    %c0_i32_0 = arith.constant 0 : i32
    %c0_i32_1 = arith.constant 0 : i32
    return %c0_i32, %c0_i32_0 : i32, i32
  }
  func.func @transform_15(%arg0: i32, %arg1: i32) -> (i32, i32) {
    %c0_i32 = arith.constant 0 : i32
    %c0_i32_0 = arith.constant 0 : i32
    %c0_i32_1 = arith.constant 0 : i32
    return %c0_i32, %c0_i32_0 : i32, i32
  }
  func.func @transform_16(%arg0: i32, %arg1: i32) -> (i32, i32) {
    %c0_i32 = arith.constant 0 : i32
    %c0_i32_0 = arith.constant 0 : i32
    %c0_i32_1 = arith.constant 0 : i32
    return %c0_i32, %c0_i32_0 : i32, i32
  }
  func.func @transform_17(%arg0: i32, %arg1: i32) -> (i32, i32, i32) {
    %c0_i32 = arith.constant 0 : i32
    %c0_i32_0 = arith.constant 0 : i32
    return %arg0, %arg1, %c0_i32 : i32, i32, i32
  }
}

</mosaic_0001>

<llo_original>
// kernel: tpu_custom_call.1
$region0: #{tpu_custom_call.1}
  #allocation0 [shape = 'u32[]', space=smem, size = 0x4, offset = 0x4, fixed_abs, tag = 'smem constant byte address 0x4 - core index']
  #allocation1 [shape = 'u32[72,128]{1,0:T(1,128)}', space=vmem, size = 0x9000, scoped, tag = 'internal scratch']
  #allocation2 [shape = 'bf16[6,8,8]{2,1,0:T(8,128)(2,1)}', space=vmem, size = 0x3000, scoped, tag = 'scratch operand']
  #allocation3 [shape = 'bf16[6,8,8]{2,1,0:T(8,128)(2,1)}', space=vmem, size = 0x3000, scoped, tag = 'scratch operand']
  %s0 = inlined_call_operand.hbm [shape: f32[2,8,128], index: 0, kind: input, shape index: {}, may-alias: {0,17}]
  %s1 = inlined_call_operand.vmem [shape: f32[8,8], index: 1, kind: input, shape index: {}]
  %s2 = inlined_call_operand.hbm [shape: f32[8,8], index: 2, kind: input, shape index: {}]
  %s3 = inlined_call_operand.vmem [shape: f32[1,128], index: 3, kind: input, shape index: {}]
  %s4 = inlined_call_operand.vmem [shape: f32[1,128], index: 4, kind: input, shape index: {}]
  %s5 = inlined_call_operand.vmem [shape: bf16[128,48], index: 5, kind: input, shape index: {}]
  %s6 = inlined_call_operand.hbm [shape: f32[1,48], index: 6, kind: input, shape index: {}]
  %s7 = inlined_call_operand.vmem [shape: bf16[128,48], index: 7, kind: input, shape index: {}]
  %s8 = inlined_call_operand.vmem [shape: f32[1,48], index: 8, kind: input, shape index: {}]
  %s9 = inlined_call_operand.vmem [shape: bf16[128,48], index: 9, kind: input, shape index: {}]
  %s10 = inlined_call_operand.vmem [shape: f32[1,48], index: 10, kind: input, shape index: {}]
  %s11 = inlined_call_operand.vmem [shape: bf16[6,8,128], index: 11, kind: input, shape index: {}]
  %s12 = inlined_call_operand.vmem [shape: f32[1,128], index: 12, kind: input, shape index: {}]
  %s13 = inlined_call_operand.vmem [shape: bf16[128,256], index: 13, kind: input, shape index: {}]
  %s14 = inlined_call_operand.vmem [shape: f32[1,256], index: 14, kind: input, shape index: {}]
  %s15 = inlined_call_operand.vmem [shape: bf16[128,128], index: 15, kind: input, shape index: {}]
  %s16 = inlined_call_operand.vmem [shape: f32[1,128], index: 16, kind: input, shape index: {}]
  %s17 = inlined_call_operand.hbm [shape: f32[2,8,128], index: 17, kind: output, shape index: {}, may-alias: {0,17}]
  %s18 = sld [smem:[#allocation0]]
  $region117: #{tpu_custom_call.1} parent=0
    _
  %s20 = ssub.s32 1, %s18
  %s21 = scalar_select 0, %s20, %s18
  $region1: #{tpu_custom_call.1} parent=0
    #allocation4 [shape = 'u8[8192]{0}', space=vmem, size = 0x2000, scoped, tag = 'input window, operand 0']
    #allocation5 [shape = 's32[2]{0}', space=sflag, size = 0x8, scoped, tag = 'scoped memory for tpu_custom_call.1']
    #allocation6 [shape = 's32[2]{0}', space=sflag, size = 0x8, scoped, tag = 'scoped memory for tpu_custom_call.1']
    #allocation7 [shape = 'u8[4096]{0}', space=vmem, size = 0x1000, scoped, tag = 'input window, operand 2, single buffered']
    #allocation8 [shape = 's32[1]{0}', space=sflag, size = 0x4, scoped, tag = 'scoped memory for tpu_custom_call.1']
    #allocation9 [shape = 'u8[512]{0}', space=vmem, size = 0x400, scoped, tag = 'input window, operand 6, single buffered']
    #allocation10 [shape = 'u8[8192]{0}', space=vmem, size = 0x2000, scoped, tag = 'output window, operand 0']
    %22 = vsyncpa [#allocation5], 0
    %s23 = scalar_lea.sflag [#allocation5], 1
    %24 = vsyncpa %s23, 0
    %25 = vsyncpa [#allocation8], 0
    %26 = vsyncpa [#allocation6], 0
    %s27 = scalar_lea.sflag [#allocation6], 1
    %28 = vsyncpa %s27, 0
    loop: start=0, step=1, limit=4
    $region2: #{tpu_custom_call.1} parent=1 // loop_pre_header
      _
    $region3: #{tpu_custom_call.1} parent=1 // loop_header
      %s30 = sphi 0, %s34
      %p31 = scmp.ge.s32.totalorder %s30, 4
      %s37 = sphi 0, %s49
      %s38 = sphi 0, %s45
      %s39 = sphi 0, %s37
      %s40 = sphi 0, %s38
      %s41 = sphi 0, %s39
      %s42 = sphi 0, %s40
      %s52 = sphi 0, %s54
      %s55 = sphi 0, %s52
      %s56 = sphi 0, %s55
      %s72 = sphi 0, %s56
      %s76 = sphi 0, %s76
      %s78 = sphi 0, %s76
      %s79 = sphi 0, %s78
      %s93 = sphi 0, %s79
      %s97 = sphi 0, %s97
      %s99 = sphi 0, %s97
      %s100 = sphi 0, %s99
      %s114 = sphi 0, %s100
      %s118 = sphi 0, %s118
      %s120 = sphi 0, %s118
      %s121 = sphi 0, %s120
      %s135 = sphi 0, %s121
      %s139 = sphi 0, %s139
      %s141 = sphi 0, %s139
      %s142 = sphi 0, %s141
      %s156 = sphi 0, %s142
      %s160 = sphi 0, %s160
      %s162 = sphi 0, %s160
      %s163 = sphi 0, %s162
      %s177 = sphi 0, %s163
      %s181 = sphi 0, %s181
      %s183 = sphi 0, %s181
      %s184 = sphi 0, %s183
      %s198 = sphi 0, %s184
      %s202 = sphi 0, %s202
      %s204 = sphi 0, %s202
      %s205 = sphi 0, %s204
      %s219 = sphi 0, %s205
      %s223 = sphi 0, %s223
      %s225 = sphi 0, %s223
      %s226 = sphi 0, %s225
      %s240 = sphi 0, %s226
      %s244 = sphi 0, %s244
      %s246 = sphi 0, %s244
      %s247 = sphi 0, %s246
      %s261 = sphi 0, %s247
      %s265 = sphi 0, %s265
      %s267 = sphi 0, %s265
      %s268 = sphi 0, %s267
      %s282 = sphi 0, %s268
      %s286 = sphi 0, %s286
      %s288 = sphi 0, %s286
      %s289 = sphi 0, %s288
      %s303 = sphi 0, %s289
      %s307 = sphi 0, %s307
      %s309 = sphi 0, %s307
      %s310 = sphi 0, %s309
      %s324 = sphi 0, %s310
      %s328 = sphi 0, %s328
      %s330 = sphi 0, %s328
      %s331 = sphi 0, %s330
      %s345 = sphi 0, %s331
      %s349 = sphi 0, %s349
      %s351 = sphi 0, %s349
      %s352 = sphi 0, %s351
      %s366 = sphi 0, %s352
      %s370 = sphi 0, %s370
      %s372 = sphi 0, %s370
      %s373 = sphi 0, %s372
      %s387 = sphi 0, %s373
      %s391 = sphi 0, %s391
      %s393 = sphi 0, %s391
      %s394 = sphi 0, %s393
      %s408 = sphi 0, %s394
      %s416 = sphi 0, %s418
      %s419 = sphi 0, %s416
      %s420 = sphi 0, %s419
      %s436 = sphi 0, %s420
    $region4: #{tpu_custom_call.1} parent=1 // loop_header_branch
      %33 = sbr.rel (%p31) target = $region8
    $region5: #{tpu_custom_call.1} parent=1 // loop_body
      %s35 = ssub.s32 %s30, 1
      %s36 = ssub.s32 %s30, 2
      %s43 = sadd.s32 1, %s38
      %p44 = scmp.ge.s32.totalorder %s43, 1
      %s45 = scalar_select %p44, 0, %s43
      %s46 = sadd.s32 1, %s37
      %s47 = scalar_select %p44, %s46, %s37
      %p48 = scmp.ge.s32.totalorder %s47, 2
      %s49 = scalar_select %p48, 0, %s47
      %s50 = ssub.s32 %s37, %s49
      %p51 = scmp.eq.s32.totalorder %s50, 0
      %s53 = sadd.s32 %s52, 1
      %s54 = scalar_select %p51, %s52, %s53
      %p57 = pneg %p51
      %p58 = scmp.eq.s32.totalorder %s30, 1
      %p59 = por %p57, %p58
      %p60 = scmp.ne.s32.totalorder %s52, %s55
      %p61 = scmp.eq.s32.totalorder %s30, 0
      %p62 = por %p60, %p61
      %p63 = scmp.ne.s32.totalorder %s52, %s55
      %p64 = scmp.eq.s32.totalorder %s35, 1
      %p65 = por %p63, %p64
      %p66 = scmp.ne.s32.totalorder %s55, %s56
      %p67 = scmp.eq.s32.totalorder %s35, 0
      %p68 = por %p66, %p67
      %p69 = scmp.ne.s32.totalorder %s55, %s56
      %p70 = scmp.eq.s32.totalorder %s36, 1
      %p71 = por %p69, %p70
      %p73 = scmp.ne.s32.totalorder %s56, %s72
      %p74 = scmp.eq.s32.totalorder %s36, 0
      %p75 = por %p73, %p74
      %s77 = sadd.s32 %s76, 1
      %p80 = scmp.eq.s32.totalorder %s30, 1
      %p81 = scmp.ne.s32.totalorder %s76, %s78
      %p82 = scmp.eq.s32.totalorder %s30, 0
      %p83 = por %p81, %p82
      %p84 = scmp.ne.s32.totalorder %s76, %s78
      %p85 = scmp.eq.s32.totalorder %s35, 1
      %p86 = por %p84, %p85
      %p87 = scmp.ne.s32.totalorder %s78, %s79
      %p88 = scmp.eq.s32.totalorder %s35, 0
      %p89 = por %p87, %p88
      %p90 = scmp.ne.s32.totalorder %s78, %s79
      %p91 = scmp.eq.s32.totalorder %s36, 1
      %p92 = por %p90, %p91
      %p94 = scmp.ne.s32.totalorder %s79, %s93
      %p95 = scmp.eq.s32.totalorder %s36, 0
      %p96 = por %p94, %p95
      %s98 = sadd.s32 %s97, 1
      %p101 = scmp.eq.s32.totalorder %s30, 1
      %p102 = scmp.ne.s32.totalorder %s97, %s99
      %p103 = scmp.eq.s32.totalorder %s30, 0
      %p104 = por %p102, %p103
      %p105 = scmp.ne.s32.totalorder %s97, %s99
      %p106 = scmp.eq.s32.totalorder %s35, 1
      %p107 = por %p105, %p106
      %p108 = scmp.ne.s32.totalorder %s99, %s100
      %p109 = scmp.eq.s32.totalorder %s35, 0
      %p110 = por %p108, %p109
      %p111 = scmp.ne.s32.totalorder %s99, %s100
      %p112 = scmp.eq.s32.totalorder %s36, 1
      %p113 = por %p111, %p112
      %p115 = scmp.ne.s32.totalorder %s100, %s114
      %p116 = scmp.eq.s32.totalorder %s36, 0
      %p117 = por %p115, %p116
      %s119 = sadd.s32 %s118, 1
      %p122 = scmp.eq.s32.totalorder %s30, 1
      %p123 = scmp.ne.s32.totalorder %s118, %s120
      %p124 = scmp.eq.s32.totalorder %s30, 0
      %p125 = por %p123, %p124
      %p126 = scmp.ne.s32.totalorder %s118, %s120
      %p127 = scmp.eq.s32.totalorder %s35, 1
      %p128 = por %p126, %p127
      %p129 = scmp.ne.s32.totalorder %s120, %s121
      %p130 = scmp.eq.s32.totalorder %s35, 0
      %p131 = por %p129, %p130
      %p132 = scmp.ne.s32.totalorder %s120, %s121
      %p133 = scmp.eq.s32.totalorder %s36, 1
      %p134 = por %p132, %p133
      %p136 = scmp.ne.s32.totalorder %s121, %s135
      %p137 = scmp.eq.s32.totalorder %s36, 0
      %p138 = por %p136, %p137
      %s140 = sadd.s32 %s139, 1
      %p143 = scmp.eq.s32.totalorder %s30, 1
      %p144 = scmp.ne.s32.totalorder %s139, %s141
      %p145 = scmp.eq.s32.totalorder %s30, 0
      %p146 = por %p144, %p145
      %p147 = scmp.ne.s32.totalorder %s139, %s141
      %p148 = scmp.eq.s32.totalorder %s35, 1
      %p149 = por %p147, %p148
      %p150 = scmp.ne.s32.totalorder %s141, %s142
      %p151 = scmp.eq.s32.totalorder %s35, 0
      %p152 = por %p150, %p151
      %p153 = scmp.ne.s32.totalorder %s141, %s142
      %p154 = scmp.eq.s32.totalorder %s36, 1
      %p155 = por %p153, %p154
      %p157 = scmp.ne.s32.totalorder %s142, %s156
      %p158 = scmp.eq.s32.totalorder %s36, 0
      %p159 = por %p157, %p158
      %s161 = sadd.s32 %s160, 1
      %p164 = scmp.eq.s32.totalorder %s30, 1
      %p165 = scmp.ne.s32.totalorder %s160, %s162
      %p166 = scmp.eq.s32.totalorder %s30, 0
      %p167 = por %p165, %p166
      %p168 = scmp.ne.s32.totalorder %s160, %s162
      %p169 = scmp.eq.s32.totalorder %s35, 1
      %p170 = por %p168, %p169
      %p171 = scmp.ne.s32.totalorder %s162, %s163
      %p172 = scmp.eq.s32.totalorder %s35, 0
      %p173 = por %p171, %p172
      %p174 = scmp.ne.s32.totalorder %s162, %s163
      %p175 = scmp.eq.s32.totalorder %s36, 1
      %p176 = por %p174, %p175
      %p178 = scmp.ne.s32.totalorder %s163, %s177
      %p179 = scmp.eq.s32.totalorder %s36, 0
      %p180 = por %p178, %p179
      %s182 = sadd.s32 %s181, 1
      %p185 = scmp.eq.s32.totalorder %s30, 1
      %p186 = scmp.ne.s32.totalorder %s181, %s183
      %p187 = scmp.eq.s32.totalorder %s30, 0
      %p188 = por %p186, %p187
      %p189 = scmp.ne.s32.totalorder %s181, %s183
      %p190 = scmp.eq.s32.totalorder %s35, 1
      %p191 = por %p189, %p190
      %p192 = scmp.ne.s32.totalorder %s183, %s184
      %p193 = scmp.eq.s32.totalorder %s35, 0
      %p194 = por %p192, %p193
      %p195 = scmp.ne.s32.totalorder %s183, %s184
      %p196 = scmp.eq.s32.totalorder %s36, 1
      %p197 = por %p195, %p196
      %p199 = scmp.ne.s32.totalorder %s184, %s198
      %p200 = scmp.eq.s32.totalorder %s36, 0
      %p201 = por %p199, %p200
      %s203 = sadd.s32 %s202, 1
      %p206 = scmp.eq.s32.totalorder %s30, 1
      %p207 = scmp.ne.s32.totalorder %s202, %s204
      %p208 = scmp.eq.s32.totalorder %s30, 0
      %p209 = por %p207, %p208
      %p210 = scmp.ne.s32.totalorder %s202, %s204
      %p211 = scmp.eq.s32.totalorder %s35, 1
      %p212 = por %p210, %p211
      %p213 = scmp.ne.s32.totalorder %s204, %s205
      %p214 = scmp.eq.s32.totalorder %s35, 0
      %p215 = por %p213, %p214
      %p216 = scmp.ne.s32.totalorder %s204, %s205
      %p217 = scmp.eq.s32.totalorder %s36, 1
      %p218 = por %p216, %p217
      %p220 = scmp.ne.s32.totalorder %s205, %s219
      %p221 = scmp.eq.s32.totalorder %s36, 0
      %p222 = por %p220, %p221
      %s224 = sadd.s32 %s223, 1
      %p227 = scmp.eq.s32.totalorder %s30, 1
      %p228 = scmp.ne.s32.totalorder %s223, %s225
      %p229 = scmp.eq.s32.totalorder %s30, 0
      %p230 = por %p228, %p229
      %p231 = scmp.ne.s32.totalorder %s223, %s225
      %p232 = scmp.eq.s32.totalorder %s35, 1
      %p233 = por %p231, %p232
      %p234 = scmp.ne.s32.totalorder %s225, %s226
      %p235 = scmp.eq.s32.totalorder %s35, 0
      %p236 = por %p234, %p235
      %p237 = scmp.ne.s32.totalorder %s225, %s226
      %p238 = scmp.eq.s32.totalorder %s36, 1
      %p239 = por %p237, %p238
      %p241 = scmp.ne.s32.totalorder %s226, %s240
      %p242 = scmp.eq.s32.totalorder %s36, 0
      %p243 = por %p241, %p242
      %s245 = sadd.s32 %s244, 1
      %p248 = scmp.eq.s32.totalorder %s30, 1
      %p249 = scmp.ne.s32.totalorder %s244, %s246
      %p250 = scmp.eq.s32.totalorder %s30, 0
      %p251 = por %p249, %p250
      %p252 = scmp.ne.s32.totalorder %s244, %s246
      %p253 = scmp.eq.s32.totalorder %s35, 1
      %p254 = por %p252, %p253
      %p255 = scmp.ne.s32.totalorder %s246, %s247
      %p256 = scmp.eq.s32.totalorder %s35, 0
      %p257 = por %p255, %p256
      %p258 = scmp.ne.s32.totalorder %s246, %s247
      %p259 = scmp.eq.s32.totalorder %s36, 1
      %p260 = por %p258, %p259
      %p262 = scmp.ne.s32.totalorder %s247, %s261
      %p263 = scmp.eq.s32.totalorder %s36, 0
      %p264 = por %p262, %p263
      %s266 = sadd.s32 %s265, 1
      %p269 = scmp.eq.s32.totalorder %s30, 1
      %p270 = scmp.ne.s32.totalorder %s265, %s267
      %p271 = scmp.eq.s32.totalorder %s30, 0
      %p272 = por %p270, %p271
      %p273 = scmp.ne.s32.totalorder %s265, %s267
      %p274 = scmp.eq.s32.totalorder %s35, 1
      %p275 = por %p273, %p274
      %p276 = scmp.ne.s32.totalorder %s267, %s268
      %p277 = scmp.eq.s32.totalorder %s35, 0
      %p278 = por %p276, %p277
      %p279 = scmp.ne.s32.totalorder %s267, %s268
      %p280 = scmp.eq.s32.totalorder %s36, 1
      %p281 = por %p279, %p280
      %p283 = scmp.ne.s32.totalorder %s268, %s282
      %p284 = scmp.eq.s32.totalorder %s36, 0
      %p285 = por %p283, %p284
      %s287 = sadd.s32 %s286, 1
      %p290 = scmp.eq.s32.totalorder %s30, 1
      %p291 = scmp.ne.s32.totalorder %s286, %s288
      %p292 = scmp.eq.s32.totalorder %s30, 0
      %p293 = por %p291, %p292
      %p294 = scmp.ne.s32.totalorder %s286, %s288
      %p295 = scmp.eq.s32.totalorder %s35, 1
      %p296 = por %p294, %p295
      %p297 = scmp.ne.s32.totalorder %s288, %s289
      %p298 = scmp.eq.s32.totalorder %s35, 0
      %p299 = por %p297, %p298
      %p300 = scmp.ne.s32.totalorder %s288, %s289
      %p301 = scmp.eq.s32.totalorder %s36, 1
      %p302 = por %p300, %p301
      %p304 = scmp.ne.s32.totalorder %s289, %s303
      %p305 = scmp.eq.s32.totalorder %s36, 0
      %p306 = por %p304, %p305
      %s308 = sadd.s32 %s307, 1
      %p311 = scmp.eq.s32.totalorder %s30, 1
      %p312 = scmp.ne.s32.totalorder %s307, %s309
      %p313 = scmp.eq.s32.totalorder %s30, 0
      %p314 = por %p312, %p313
      %p315 = scmp.ne.s32.totalorder %s307, %s309
      %p316 = scmp.eq.s32.totalorder %s35, 1
      %p317 = por %p315, %p316
      %p318 = scmp.ne.s32.totalorder %s309, %s310
      %p319 = scmp.eq.s32.totalorder %s35, 0
      %p320 = por %p318, %p319
      %p321 = scmp.ne.s32.totalorder %s309, %s310
      %p322 = scmp.eq.s32.totalorder %s36, 1
      %p323 = por %p321, %p322
      %p325 = scmp.ne.s32.totalorder %s310, %s324
      %p326 = scmp.eq.s32.totalorder %s36, 0
      %p327 = por %p325, %p326
      %s329 = sadd.s32 %s328, 1
      %p332 = scmp.eq.s32.totalorder %s30, 1
      %p333 = scmp.ne.s32.totalorder %s328, %s330
      %p334 = scmp.eq.s32.totalorder %s30, 0
      %p335 = por %p333, %p334
      %p336 = scmp.ne.s32.totalorder %s328, %s330
      %p337 = scmp.eq.s32.totalorder %s35, 1
      %p338 = por %p336, %p337
      %p339 = scmp.ne.s32.totalorder %s330, %s331
      %p340 = scmp.eq.s32.totalorder %s35, 0
      %p341 = por %p339, %p340
      %p342 = scmp.ne.s32.totalorder %s330, %s331
      %p343 = scmp.eq.s32.totalorder %s36, 1
      %p344 = por %p342, %p343
      %p346 = scmp.ne.s32.totalorder %s331, %s345
      %p347 = scmp.eq.s32.totalorder %s36, 0
      %p348 = por %p346, %p347
      %s350 = sadd.s32 %s349, 1
      %p353 = scmp.eq.s32.totalorder %s30, 1
      %p354 = scmp.ne.s32.totalorder %s349, %s351
      %p355 = scmp.eq.s32.totalorder %s30, 0
      %p356 = por %p354, %p355
      %p357 = scmp.ne.s32.totalorder %s349, %s351
      %p358 = scmp.eq.s32.totalorder %s35, 1
      %p359 = por %p357, %p358
      %p360 = scmp.ne.s32.totalorder %s351, %s352
      %p361 = scmp.eq.s32.totalorder %s35, 0
      %p362 = por %p360, %p361
      %p363 = scmp.ne.s32.totalorder %s351, %s352
      %p364 = scmp.eq.s32.totalorder %s36, 1
      %p365 = por %p363, %p364
      %p367 = scmp.ne.s32.totalorder %s352, %s366
      %p368 = scmp.eq.s32.totalorder %s36, 0
      %p369 = por %p367, %p368
      %s371 = sadd.s32 %s370, 1
      %p374 = scmp.eq.s32.totalorder %s30, 1
      %p375 = scmp.ne.s32.totalorder %s370, %s372
      %p376 = scmp.eq.s32.totalorder %s30, 0
      %p377 = por %p375, %p376
      %p378 = scmp.ne.s32.totalorder %s370, %s372
      %p379 = scmp.eq.s32.totalorder %s35, 1
      %p380 = por %p378, %p379
      %p381 = scmp.ne.s32.totalorder %s372, %s373
      %p382 = scmp.eq.s32.totalorder %s35, 0
      %p383 = por %p381, %p382
      %p384 = scmp.ne.s32.totalorder %s372, %s373
      %p385 = scmp.eq.s32.totalorder %s36, 1
      %p386 = por %p384, %p385
      %p388 = scmp.ne.s32.totalorder %s373, %s387
      %p389 = scmp.eq.s32.totalorder %s36, 0
      %p390 = por %p388, %p389
      %s392 = sadd.s32 %s391, 1
      %p395 = scmp.eq.s32.totalorder %s30, 1
      %p396 = scmp.ne.s32.totalorder %s391, %s393
      %p397 = scmp.eq.s32.totalorder %s30, 0
      %p398 = por %p396, %p397
      %p399 = scmp.ne.s32.totalorder %s391, %s393
      %p400 = scmp.eq.s32.totalorder %s35, 1
      %p401 = por %p399, %p400
      %p402 = scmp.ne.s32.totalorder %s393, %s394
      %p403 = scmp.eq.s32.totalorder %s35, 0
      %p404 = por %p402, %p403
      %p405 = scmp.ne.s32.totalorder %s393, %s394
      %p406 = scmp.eq.s32.totalorder %s36, 1
      %p407 = por %p405, %p406
      %p409 = scmp.ne.s32.totalorder %s394, %s408
      %p410 = scmp.eq.s32.totalorder %s36, 0
      %p411 = por %p409, %p410
      %s412 = ssub.s32 %s37, %s49
      %s413 = ssub.s32 %s38, %s45
      %s414 = sor.u32 %s412, %s413
      %p415 = scmp.eq.s32.totalorder %s414, 0
      %s417 = sadd.s32 %s416, 1
      %s418 = scalar_select %p415, %s416, %s417
      %p421 = pneg %p415
      %p422 = scmp.eq.s32.totalorder %s30, 1
      %p423 = por %p421, %p422
      %p424 = scmp.ne.s32.totalorder %s416, %s419
      %p425 = scmp.eq.s32.totalorder %s30, 0
      %p426 = por %p424, %p425
      %p427 = scmp.ne.s32.totalorder %s416, %s419
      %p428 = scmp.eq.s32.totalorder %s35, 1
      %p429 = por %p427, %p428
      %p430 = scmp.ne.s32.totalorder %s419, %s420
      %p431 = scmp.eq.s32.totalorder %s35, 0
      %p432 = por %p430, %p431
      %p433 = scmp.ne.s32.totalorder %s419, %s420
      %p434 = scmp.eq.s32.totalorder %s36, 1
      %p435 = por %p433, %p434
      %p437 = scmp.ne.s32.totalorder %s420, %s436
      %p438 = scmp.eq.s32.totalorder %s36, 0
      %p439 = por %p437, %p438
      %p440 = scmp.le.s32.totalorder 1, %s30
      %p441 = scmp.lt.s32.totalorder %s30, 3
      %p442 = pnand %p440, %p441
      %p443 = pneg %p442
      // Predicated region
      $region9: #{tpu_custom_call.1} parent=5 // pred_check
        _
      $region10: #{tpu_custom_call.1} parent=5 // pred_check_branch
        %445 = sbr.rel (%p442) target = $region12
      $region11: #{tpu_custom_call.1} parent=5 // pred_region
        %s446 = ssub.s32 %s30, 1
        // Predicated region
        $region13: #{tpu_custom_call.1} parent=11 // pred_check
          %p447 = pneg %p89
        $region14: #{tpu_custom_call.1} parent=11 // pred_check_branch
          %449 = sbr.rel (%p447) target = $region16
        $region15: #{tpu_custom_call.1} parent=11 // pred_region
          _
        $region16: #{tpu_custom_call.1} parent=11 // pred_fallthru
          _
        // Predicated region
        $region17: #{tpu_custom_call.1} parent=11 // pred_check
          %p450 = pneg %p110
        $region18: #{tpu_custom_call.1} parent=11 // pred_check_branch
          %452 = sbr.rel (%p450) target = $region20
        $region19: #{tpu_custom_call.1} parent=11 // pred_region
          %454 = vsyncadd [#allocation8], 0
          %s456 = sshll.u32 %s2, 4
          %s457 = int_to_ptr.hbm [resolvable:$true] %s456
          %s458 = sshll.u32 [#allocation7], 4
          %s459 = int_to_ptr.vmem [resolvable:$true] %s458
          %461 = dma.hbm_to_vmem [thread:$0]  %s457, 128, %s459, [#allocation8]
        $region20: #{tpu_custom_call.1} parent=11 // pred_fallthru
          _
        // Predicated region
        $region21: #{tpu_custom_call.1} parent=11 // pred_check
          %p462 = pneg %p131
        $region22: #{tpu_custom_call.1} parent=11 // pred_check_branch
          %464 = sbr.rel (%p462) target = $region24
        $region23: #{tpu_custom_call.1} parent=11 // pred_region
          _
        $region24: #{tpu_custom_call.1} parent=11 // pred_fallthru
          _
        // Predicated region
        $region25: #{tpu_custom_call.1} parent=11 // pred_check
          %p465 = pneg %p152
        $region26: #{tpu_custom_call.1} parent=11 // pred_check_branch
          %467 = sbr.rel (%p465) target = $region28
        $region27: #{tpu_custom_call.1} parent=11 // pred_region
          _
        $region28: #{tpu_custom_call.1} parent=11 // pred_fallthru
          _
        // Predicated region
        $region29: #{tpu_custom_call.1} parent=11 // pred_check
          %p468 = pneg %p173
        $region30: #{tpu_custom_call.1} parent=11 // pred_check_branch
          %470 = sbr.rel (%p468) target = $region32
        $region31: #{tpu_custom_call.1} parent=11 // pred_region
          _
        $region32: #{tpu_custom_call.1} parent=11 // pred_fallthru
          _
        // Predicated region
        $region33: #{tpu_custom_call.1} parent=11 // pred_check
          %p471 = pneg %p194
        $region34: #{tpu_custom_call.1} parent=11 // pred_check_branch
          %473 = sbr.rel (%p471) target = $region36
        $region35: #{tpu_custom_call.1} parent=11 // pred_region
          %475 = vsyncadd [#allocation8], 0
          %s477 = sshll.u32 %s6, 4
          %s478 = int_to_ptr.hbm [resolvable:$true] %s477
          %s479 = sshll.u32 [#allocation9], 4
          %s480 = int_to_ptr.vmem [resolvable:$true] %s479
          %482 = dma.hbm_to_vmem [thread:$0]  %s478, 16, %s480, [#allocation8]
        $region36: #{tpu_custom_call.1} parent=11 // pred_fallthru
          _
        // Predicated region
        $region37: #{tpu_custom_call.1} parent=11 // pred_check
          %p483 = pneg %p215
        $region38: #{tpu_custom_call.1} parent=11 // pred_check_branch
          %485 = sbr.rel (%p483) target = $region40
        $region39: #{tpu_custom_call.1} parent=11 // pred_region
          _
        $region40: #{tpu_custom_call.1} parent=11 // pred_fallthru
          _
        // Predicated region
        $region41: #{tpu_custom_call.1} parent=11 // pred_check
          %p486 = pneg %p236
        $region42: #{tpu_custom_call.1} parent=11 // pred_check_branch
          %488 = sbr.rel (%p486) target = $region44
        $region43: #{tpu_custom_call.1} parent=11 // pred_region
          _
        $region44: #{tpu_custom_call.1} parent=11 // pred_fallthru
          _
        // Predicated region
        $region45: #{tpu_custom_call.1} parent=11 // pred_check
          %p489 = pneg %p257
        $region46: #{tpu_custom_call.1} parent=11 // pred_check_branch
          %491 = sbr.rel (%p489) target = $region48
        $region47: #{tpu_custom_call.1} parent=11 // pred_region
          _
        $region48: #{tpu_custom_call.1} parent=11 // pred_fallthru
          _
        // Predicated region
        $region49: #{tpu_custom_call.1} parent=11 // pred_check
          %p492 = pneg %p278
        $region50: #{tpu_custom_call.1} parent=11 // pred_check_branch
          %494 = sbr.rel (%p492) target = $region52
        $region51: #{tpu_custom_call.1} parent=11 // pred_region
          _
        $region52: #{tpu_custom_call.1} parent=11 // pred_fallthru
          _
        // Predicated region
        $region53: #{tpu_custom_call.1} parent=11 // pred_check
          %p495 = pneg %p299
        $region54: #{tpu_custom_call.1} parent=11 // pred_check_branch
          %497 = sbr.rel (%p495) target = $region56
        $region55: #{tpu_custom_call.1} parent=11 // pred_region
          _
        $region56: #{tpu_custom_call.1} parent=11 // pred_fallthru
          _
        // Predicated region
        $region57: #{tpu_custom_call.1} parent=11 // pred_check
          %p498 = pneg %p320
        $region58: #{tpu_custom_call.1} parent=11 // pred_check_branch
          %500 = sbr.rel (%p498) target = $region60
        $region59: #{tpu_custom_call.1} parent=11 // pred_region
          _
        $region60: #{tpu_custom_call.1} parent=11 // pred_fallthru
          _
        // Predicated region
        $region61: #{tpu_custom_call.1} parent=11 // pred_check
          %p501 = pneg %p341
        $region62: #{tpu_custom_call.1} parent=11 // pred_check_branch
          %503 = sbr.rel (%p501) target = $region64
        $region63: #{tpu_custom_call.1} parent=11 // pred_region
          _
        $region64: #{tpu_custom_call.1} parent=11 // pred_fallthru
          _
        // Predicated region
        $region65: #{tpu_custom_call.1} parent=11 // pred_check
          %p504 = pneg %p362
        $region66: #{tpu_custom_call.1} parent=11 // pred_check_branch
          %506 = sbr.rel (%p504) target = $region68
        $region67: #{tpu_custom_call.1} parent=11 // pred_region
          _
        $region68: #{tpu_custom_call.1} parent=11 // pred_fallthru
          _
        // Predicated region
        $region69: #{tpu_custom_call.1} parent=11 // pred_check
          %p507 = pneg %p383
        $region70: #{tpu_custom_call.1} parent=11 // pred_check_branch
          %509 = sbr.rel (%p507) target = $region72
        $region71: #{tpu_custom_call.1} parent=11 // pred_region
          _
        $region72: #{tpu_custom_call.1} parent=11 // pred_fallthru
          _
        // Predicated region
        $region73: #{tpu_custom_call.1} parent=11 // pred_check
          %p510 = pneg %p404
        $region74: #{tpu_custom_call.1} parent=11 // pred_check_branch
          %512 = sbr.rel (%p510) target = $region76
        $region75: #{tpu_custom_call.1} parent=11 // pred_region
          _
        $region76: #{tpu_custom_call.1} parent=11 // pred_fallthru
          _
      $region12: #{tpu_custom_call.1} parent=5 // pred_fallthru
        _
      %p513 = scmp.lt.s32.totalorder %s30, 2
      // Predicated region
      $region77: #{tpu_custom_call.1} parent=5 // pred_check
        %p514 = pneg %p513
      $region78: #{tpu_custom_call.1} parent=5 // pred_check_branch
        %516 = sbr.rel (%p514) target = $region80
      $region79: #{tpu_custom_call.1} parent=5 // pred_region
        // Predicated region
        $region81: #{tpu_custom_call.1} parent=79 // pred_check
          %p517 = pneg %p62
        $region82: #{tpu_custom_call.1} parent=79 // pred_check_branch
          %519 = sbr.rel (%p517) target = $region84
        $region83: #{tpu_custom_call.1} parent=79 // pred_region
          %s520 = sand.u32 %s52, 1
          %s521 = scalar_lea.sflag [#allocation5], %s520
          %s522 = sand.u32 %s52, 1
          %s523 = smul.addr %s522, 8
          %s524 = scalar_lea.vmem [#allocation4], %s523
          %526 = vsyncadd %s521, 0
          %s527 = smul.addr %s37, 8
          %s528 = scalar_lea.hbm %s0, %s527
          %s530 = sshll.u32 %s528, 4
          %s531 = int_to_ptr.hbm [resolvable:$true] %s530
          %s532 = sshll.u32 %s524, 4
          %s533 = int_to_ptr.vmem [resolvable:$true] %s532
          %535 = dma.hbm_to_vmem [thread:$0]  %s531, 128, %s533, %s521
        $region84: #{tpu_custom_call.1} parent=79 // pred_fallthru
          _
      $region80: #{tpu_custom_call.1} parent=5 // pred_fallthru
        _
      %p536 = scmp.le.s32.totalorder 1, %s30
      %p537 = scmp.lt.s32.totalorder %s30, 3
      %p538 = pnand %p536, %p537
      %p539 = pneg %p538
      // Predicated region
      $region85: #{tpu_custom_call.1} parent=5 // pred_check
        _
      $region86: #{tpu_custom_call.1} parent=5 // pred_check_branch
        %541 = sbr.rel (%p538) target = $region88
      $region87: #{tpu_custom_call.1} parent=5 // pred_region
        %s542 = ssub.s32 %s30, 1
        %s543 = sand.u32 %s55, 1
        %s544 = scalar_lea.sflag [#allocation5], %s543
        %s545 = sand.u32 %s55, 1
        %s546 = smul.addr %s545, 8
        %s547 = scalar_lea.vmem [#allocation4], %s546
        // Predicated region
        $region89: #{tpu_custom_call.1} parent=87 // pred_check
          %p548 = pneg %p68
        $region90: #{tpu_custom_call.1} parent=87 // pred_check_branch
          %550 = sbr.rel (%p548) target = $region92
        $region91: #{tpu_custom_call.1} parent=87 // pred_region
          %552 = dma.done %s544, 128
        $region92: #{tpu_custom_call.1} parent=87 // pred_fallthru
          _
        // Predicated region
        $region93: #{tpu_custom_call.1} parent=87 // pred_check
          %p553 = pneg %p110
        $region94: #{tpu_custom_call.1} parent=87 // pred_check_branch
          %555 = sbr.rel (%p553) target = $region96
        $region95: #{tpu_custom_call.1} parent=87 // pred_region
          %557 = dma.done [#allocation8], 128
        $region96: #{tpu_custom_call.1} parent=87 // pred_fallthru
          _
        // Predicated region
        $region97: #{tpu_custom_call.1} parent=87 // pred_check
          %p558 = pneg %p194
        $region98: #{tpu_custom_call.1} parent=87 // pred_check_branch
          %560 = sbr.rel (%p558) target = $region100
        $region99: #{tpu_custom_call.1} parent=87 // pred_region
          %562 = dma.done [#allocation8], 16
        $region100: #{tpu_custom_call.1} parent=87 // pred_fallthru
          _
        %s563 = sand.u32 %s55, 1
        %s564 = scalar_lea.sflag [#allocation5], %s563
        %s565 = sand.u32 %s55, 1
        %s566 = smul.addr %s565, 8
        %s567 = scalar_lea.vmem [#allocation4], %s566
        %p568 = pneg %p68
        %p569 = pneg %p65
        %p570 = pneg %p89
        %p571 = pneg %p86
        %p572 = pneg %p110
        %p573 = pneg %p107
        %p574 = pneg %p131
        %p575 = pneg %p128
        %p576 = pneg %p152
        %p577 = pneg %p149
        %p578 = pneg %p173
        %p579 = pneg %p170
        %p580 = pneg %p194
        %p581 = pneg %p191
        %p582 = pneg %p215
        %p583 = pneg %p212
        %p584 = pneg %p236
        %p585 = pneg %p233
        %p586 = pneg %p257
        %p587 = pneg %p254
        %p588 = pneg %p278
        %p589 = pneg %p275
        %p590 = pneg %p299
        %p591 = pneg %p296
        %p592 = pneg %p320
        %p593 = pneg %p317
        %p594 = pneg %p341
        %p595 = pneg %p338
        %p596 = pneg %p362
        %p597 = pneg %p359
        %p598 = pneg %p383
        %p599 = pneg %p380
        %p600 = pneg %p404
        %p601 = pneg %p401
        %p602 = pneg %p432
        %p603 = pneg %p429
        %s604 = sand.u32 %s419, 1
        %s605 = scalar_lea.sflag [#allocation6], %s604
        %s606 = sand.u32 %s419, 1
        %s607 = smul.addr %s606, 8
        %s608 = scalar_lea.vmem [#allocation10], %s607
        %p610 = scmp.eq.s32.totalorder %s40, 0
        // Predicated region
        $region101: #{tpu_custom_call.1} parent=87 // pred_check
          %p611 = pneg %p610
        $region102: #{tpu_custom_call.1} parent=87 // pred_check_branch
          %613 = sbr.rel (%p611) target = $region104
        $region103: #{tpu_custom_call.1} parent=87 // pred_region
          %v614 = vld [vmem:[%s547] sm:$0xff]
          %v615 = vld [vmem:[%s3] sm:$0x1]
          %v616 = vmul.f32 %v614, %v614
          %617 = vadd.xlane.f32.xlu0 %v616
          %v618 = vpop.xlane.xlu0 %617
          %v619 = vmul.f32 %v618, 0.020833334
          %v620 = vadd.f32 %v619, 1e-06
          %v621 = vrsqrt.pop %v620
          %v622 = vmul.f32 %v621, %v620
          %v623 = vmul.f32 %v622, %v621
          %v624 = vmul.f32 0.5, %v623
          %v625 = vsub.f32 1.5, %v624
          %v626 = vmul.f32 %v621, %v625
          %vm627 = vweird.f32 %v620
          %vm628 = vweird.f32 %v621
          %vm629 = vmor %vm627, %vm628
          %v630 = vsel %vm629, %v621, %v626
          %v631 = vmul.f32 %v614, %v630
          %v633 = vperm.slane %v615, 0
          %v635 = vmul.f32 %v631, %v633
          %v636 = vpack.c.bf16 %v635, %v635
          %v637 = vld [vmem:[%s7] sm:$0xf]
          %v638 = vld [vmem:[%s7 + $0x4] sm:$0xf]
          %v639 = vld [vmem:[%s7 + $0x8] sm:$0xf]
          %v640 = vld [vmem:[%s7 + $0xc] sm:$0xf]
          %v641 = vld [vmem:[%s7 + $0x10] sm:$0xf]
          %v642 = vld [vmem:[%s7 + $0x14] sm:$0xf]
          %v643 = vld [vmem:[%s7 + $0x18] sm:$0xf]
          %v644 = vld [vmem:[%s7 + $0x1c] sm:$0xf]
          %v645 = vld [vmem:[%s7 + $0x20] sm:$0xf]
          %v646 = vld [vmem:[%s7 + $0x24] sm:$0xf]
          %v647 = vld [vmem:[%s7 + $0x28] sm:$0xf]
          %v648 = vld [vmem:[%s7 + $0x2c] sm:$0xf]
          %v649 = vld [vmem:[%s7 + $0x30] sm:$0xf]
          %v650 = vld [vmem:[%s7 + $0x34] sm:$0xf]
          %v651 = vld [vmem:[%s7 + $0x38] sm:$0xf]
          %v652 = vld [vmem:[%s7 + $0x3c] sm:$0xf]
          %v653 = vld [vmem:[%s8] sm:$0x1]
          %v655 = vperm.slane %v653, 0
          %v673 = vunpack.c.l.b16 %v637
          %v674 = vunpack.c.l.b16 %v638
          %v675 = vunpack.c.l.b16 %v639
          %v676 = vunpack.c.l.b16 %v640
          %v677 = vunpack.c.l.b16 %v641
          %v678 = vunpack.c.l.b16 %v642
          %v679 = vunpack.c.l.b16 %v643
          %v680 = vunpack.c.l.b16 %v644
          %v681 = vunpack.c.l.b16 %v645
          %v682 = vunpack.c.l.b16 %v646
          %v683 = vunpack.c.l.b16 %v647
          %v684 = vunpack.c.l.b16 %v648
          %v685 = vunpack.c.l.b16 %v649
          %v686 = vunpack.c.l.b16 %v650
          %v687 = vunpack.c.l.b16 %v651
          %v688 = vunpack.c.l.b16 %v652
          %v689 = vpack.c.b16 %v674, %v673
          %v690 = vpack.c.b16 %v676, %v675
          %v691 = vpack.c.b16 %v678, %v677
          %v692 = vpack.c.b16 %v680, %v679
          %v693 = vpack.c.b16 %v682, %v681
          %v694 = vpack.c.b16 %v684, %v683
          %v695 = vpack.c.b16 %v686, %v685
          %v696 = vpack.c.b16 %v688, %v687
          %705 = vmatpush.bf16.msra.mxu0 %v696
          %706 = vmatpush.bf16.msra.mxu0 %v695
          %707 = vmatpush.bf16.msra.mxu0 %v694
          %708 = vmatpush.bf16.msra.mxu0 %v693
          %709 = vmatpush.bf16.msra.mxu0 %v692
          %710 = vmatpush.bf16.msra.mxu0 %v691
          %711 = vmatpush.bf16.msra.mxu0 %v690
          %712 = vmatpush.bf16.msra.mxu0 %v689
          %713 = vmatmul.bf16.gmra.mxu0 %v636
          %v714 = vpop.f32.mrf.mxu0
          %v715 = vadd.f32 %v655, %v714
          %v716 = vpop.f32.mrf.mxu0
          %717 = vdwg.mxu0
          %v718 = vld [vmem:[%s9] sm:$0xf]
          %v719 = vld [vmem:[%s9 + $0x4] sm:$0xf]
          %v720 = vld [vmem:[%s9 + $0x8] sm:$0xf]
          %v721 = vld [vmem:[%s9 + $0xc] sm:$0xf]
          %v722 = vld [vmem:[%s9 + $0x10] sm:$0xf]
          %v723 = vld [vmem:[%s9 + $0x14] sm:$0xf]
          %v724 = vld [vmem:[%s9 + $0x18] sm:$0xf]
          %v725 = vld [vmem:[%s9 + $0x1c] sm:$0xf]
          %v726 = vld [vmem:[%s9 + $0x20] sm:$0xf]
          %v727 = vld [vmem:[%s9 + $0x24] sm:$0xf]
          %v728 = vld [vmem:[%s9 + $0x28] sm:$0xf]
          %v729 = vld [vmem:[%s9 + $0x2c] sm:$0xf]
          %v730 = vld [vmem:[%s9 + $0x30] sm:$0xf]
          %v731 = vld [vmem:[%s9 + $0x34] sm:$0xf]
          %v732 = vld [vmem:[%s9 + $0x38] sm:$0xf]
          %v733 = vld [vmem:[%s9 + $0x3c] sm:$0xf]
          %v734 = vld [vmem:[%s10] sm:$0x1]
          %v736 = vperm.slane %v734, 0
          %v754 = vunpack.c.l.b16 %v718
          %v755 = vunpack.c.l.b16 %v719
          %v756 = vunpack.c.l.b16 %v720
          %v757 = vunpack.c.l.b16 %v721
          %v758 = vunpack.c.l.b16 %v722
          %v759 = vunpack.c.l.b16 %v723
          %v760 = vunpack.c.l.b16 %v724
          %v761 = vunpack.c.l.b16 %v725
          %v762 = vunpack.c.l.b16 %v726
          %v763 = vunpack.c.l.b16 %v727
          %v764 = vunpack.c.l.b16 %v728
          %v765 = vunpack.c.l.b16 %v729
          %v766 = vunpack.c.l.b16 %v730
          %v767 = vunpack.c.l.b16 %v731
          %v768 = vunpack.c.l.b16 %v732
          %v769 = vunpack.c.l.b16 %v733
          %v770 = vpack.c.b16 %v755, %v754
          %v771 = vpack.c.b16 %v757, %v756
          %v772 = vpack.c.b16 %v759, %v758
          %v773 = vpack.c.b16 %v761, %v760
          %v774 = vpack.c.b16 %v763, %v762
          %v775 = vpack.c.b16 %v765, %v764
          %v776 = vpack.c.b16 %v767, %v766
          %v777 = vpack.c.b16 %v769, %v768
          %786 = vmatpush.bf16.msra.mxu0 %v777
          %787 = vmatpush.bf16.msra.mxu0 %v776
          %788 = vmatpush.bf16.msra.mxu0 %v775
          %789 = vmatpush.bf16.msra.mxu0 %v774
          %790 = vmatpush.bf16.msra.mxu0 %v773
          %791 = vmatpush.bf16.msra.mxu0 %v772
          %792 = vmatpush.bf16.msra.mxu0 %v771
          %793 = vmatpush.bf16.msra.mxu0 %v770
          %794 = vmatmul.bf16.gmra.mxu0 %v636
          %v795 = vpop.f32.mrf.mxu0
          %v796 = vadd.f32 %v736, %v795
          %v797 = vpop.f32.mrf.mxu0
          %798 = vdwg.mxu0
          %800 = vrot.lane.b32.xlu0 %v715, 120
          %v801 = vpop.permute.xlu0 %800
          %803 = vrot.lane.b32.xlu0 %v715, 112
          %v804 = vpop.permute.xlu0 %803
          %806 = vrot.lane.b32.xlu0 %v715, 104
          %v807 = vpop.permute.xlu0 %806
          %809 = vrot.lane.b32.xlu0 %v715, 96
          %v810 = vpop.permute.xlu0 %809
          %812 = vrot.lane.b32.xlu0 %v715, 88
          %v813 = vpop.permute.xlu0 %812
          %v815 = vrot.slane %v804, 4
          %vm816 = vcmask 1047556
          %v817 = vsel %vm816, %v815, %v715
          %v818 = vrot.slane %v715, 4
          %v819 = vsel %vm816, %v804, %v818
          %v821 = vunpack.c.l.s4 1983009808
          %v822 = vunpack.c.0.s8 %v821
          %v823 = vperm.slane %v817, %v822
          %v825 = vunpack.c.l.s4 1983009808
          %v826 = vunpack.c.0.s8 %v825
          %v827 = vperm.slane %v819, %v826
          %v828 = vrot.slane %v807, 4
          %v829 = vsel %vm816, %v828, %v801
          %v830 = vrot.slane %v801, 4
          %v831 = vsel %vm816, %v807, %v830
          %v833 = vunpack.c.l.s4 1983009808
          %v834 = vunpack.c.0.s8 %v833
          %v835 = vperm.slane %v829, %v834
          %v837 = vunpack.c.l.s4 1983009808
          %v838 = vunpack.c.0.s8 %v837
          %v839 = vperm.slane %v831, %v838
          %v840 = vrot.slane %v810, 4
          %v841 = vsel %vm816, 0.0, %v840
          %v843 = vunpack.c.l.s4 1983009808
          %v844 = vunpack.c.0.s8 %v843
          %v845 = vperm.slane %v810, %v844
          %v847 = vunpack.c.l.s4 1983009808
          %v848 = vunpack.c.0.s8 %v847
          %v849 = vperm.slane %v841, %v848
          %v850 = vrot.slane %v813, 4
          %v851 = vsel %vm816, 0.0, %v850
          %v853 = vunpack.c.l.s4 1983009808
          %v854 = vunpack.c.0.s8 %v853
          %v855 = vperm.slane %v813, %v854
          %v857 = vunpack.c.l.s4 1983009808
          %v858 = vunpack.c.0.s8 %v857
          %v859 = vperm.slane %v851, %v858
          %v860 = vrot.slane %v835, 4
          %v861 = vsel %vm816, %v860, %v823
          %v862 = vrot.slane %v823, 4
          %v863 = vsel %vm816, %v835, %v862
          %v865 = vunpack.c.l.s4 1934713408
          %v866 = vunpack.c.0.s8 %v865
          %v867 = vperm.slane %v861, %v866
          %v869 = vunpack.c.l.s4 1934713408
          %v870 = vunpack.c.0.s8 %v869
          %v871 = vperm.slane %v863, %v870
          %v872 = vrot.slane %v839, 4
          %v873 = vsel %vm816, %v872, %v827
          %v874 = vrot.slane %v827, 4
          %v875 = vsel %vm816, %v839, %v874
          %v877 = vunpack.c.l.s4 1934713408
          %v878 = vunpack.c.0.s8 %v877
          %v879 = vperm.slane %v873, %v878
          %v881 = vunpack.c.l.s4 1934713408
          %v882 = vunpack.c.0.s8 %v881
          %v883 = vperm.slane %v875, %v882
          %v884 = vrot.slane %v855, 4
          %v885 = vsel %vm816, %v884, %v845
          %v886 = vrot.slane %v845, 4
          %v887 = vsel %vm816, %v855, %v886
          %v889 = vunpack.c.l.s4 1934713408
          %v890 = vunpack.c.0.s8 %v889
          %v891 = vperm.slane %v885, %v890
          %v893 = vunpack.c.l.s4 1934713408
          %v894 = vunpack.c.0.s8 %v893
          %v895 = vperm.slane %v887, %v894
          %v896 = vrot.slane %v859, 4
          %v897 = vsel %vm816, %v896, %v849
          %v898 = vrot.slane %v849, 4
          %v899 = vsel %vm816, %v859, %v898
          %v901 = vunpack.c.l.s4 1934713408
          %v902 = vunpack.c.0.s8 %v901
          %v903 = vperm.slane %v897, %v902
          %v905 = vunpack.c.l.s4 1934713408
          %v906 = vunpack.c.0.s8 %v905
          %v907 = vperm.slane %v899, %v906
          %v908 = vrot.slane %v891, 4
          %v909 = vsel %vm816, %v908, %v867
          %v910 = vrot.slane %v867, 4
          %v911 = vsel %vm816, %v891, %v910
          %v912 = vrot.slane %v895, 4
          %v913 = vsel %vm816, %v912, %v871
          %v914 = vrot.slane %v871, 4
          %v915 = vsel %vm816, %v895, %v914
          %v916 = vrot.slane %v903, 4
          %v917 = vsel %vm816, %v916, %v879
          %v918 = vrot.slane %v879, 4
          %v919 = vsel %vm816, %v903, %v918
          %v920 = vrot.slane %v907, 4
          %v921 = vsel %vm816, %v920, %v883
          %v922 = vrot.slane %v883, 4
          %v923 = vsel %vm816, %v907, %v922
          %v924 = vrot.slane %v913, 4
          %v925 = vsel %vm816, %v924, %v909
          %v926 = vrot.slane %v909, 4
          %v927 = vsel %vm816, %v913, %v926
          %v929 = vunpack.c.l.s4 1983009808
          %v930 = vunpack.c.0.s8 %v929
          %v931 = vperm.slane %v925, %v930
          %v933 = vunpack.c.l.s4 1983009808
          %v934 = vunpack.c.0.s8 %v933
          %v935 = vperm.slane %v927, %v934
          %v936 = vrot.slane %v915, 4
          %v937 = vsel %vm816, %v936, %v911
          %v938 = vrot.slane %v911, 4
          %v939 = vsel %vm816, %v915, %v938
          %v941 = vunpack.c.l.s4 1983009808
          %v942 = vunpack.c.0.s8 %v941
          %v943 = vperm.slane %v937, %v942
          %v945 = vunpack.c.l.s4 1983009808
          %v946 = vunpack.c.0.s8 %v945
          %v947 = vperm.slane %v939, %v946
          %v948 = vrot.slane %v921, 4
          %v949 = vsel %vm816, %v948, %v917
          %v950 = vrot.slane %v917, 4
          %v951 = vsel %vm816, %v921, %v950
          %v953 = vunpack.c.l.s4 1983009808
          %v954 = vunpack.c.0.s8 %v953
          %v955 = vperm.slane %v949, %v954
          %v957 = vunpack.c.l.s4 1983009808
          %v958 = vunpack.c.0.s8 %v957
          %v959 = vperm.slane %v951, %v958
          %v960 = vrot.slane %v923, 4
          %v961 = vsel %vm816, %v960, %v919
          %v962 = vrot.slane %v919, 4
          %v963 = vsel %vm816, %v923, %v962
          %v965 = vunpack.c.l.s4 1983009808
          %v966 = vunpack.c.0.s8 %v965
          %v967 = vperm.slane %v961, %v966
          %v969 = vunpack.c.l.s4 1983009808
          %v970 = vunpack.c.0.s8 %v969
          %v971 = vperm.slane %v963, %v970
          %v972 = vrot.slane %v943, 4
          %v973 = vsel %vm816, %v972, %v931
          %v974 = vrot.slane %v931, 4
          %v975 = vsel %vm816, %v943, %v974
          %v977 = vunpack.c.l.s4 1934713408
          %v978 = vunpack.c.0.s8 %v977
          %v979 = vperm.slane %v973, %v978
          %v981 = vunpack.c.l.s4 1934713408
          %v982 = vunpack.c.0.s8 %v981
          %v983 = vperm.slane %v975, %v982
          %v984 = vrot.slane %v947, 4
          %v985 = vsel %vm816, %v984, %v935
          %v987 = vunpack.c.l.s4 1934713408
          %v988 = vunpack.c.0.s8 %v987
          %v989 = vperm.slane %v985, %v988
          %v990 = vrot.slane %v967, 4
          %v991 = vsel %vm816, %v990, %v955
          %v992 = vrot.slane %v955, 4
          %v993 = vsel %vm816, %v967, %v992
          %v995 = vunpack.c.l.s4 1934713408
          %v996 = vunpack.c.0.s8 %v995
          %v997 = vperm.slane %v991, %v996
          %v999 = vunpack.c.l.s4 1934713408
          %v1000 = vunpack.c.0.s8 %v999
          %v1001 = vperm.slane %v993, %v1000
          %v1002 = vrot.slane %v971, 4
          %v1003 = vsel %vm816, %v1002, %v959
          %v1005 = vunpack.c.l.s4 1934713408
          %v1006 = vunpack.c.0.s8 %v1005
          %v1007 = vperm.slane %v1003, %v1006
          %v1008 = vrot.slane %v997, 4
          %v1009 = vsel %vm816, %v1008, %v979
          %v1010 = vrot.slane %v979, 4
          %v1011 = vsel %vm816, %v997, %v1010
          %v1012 = vrot.slane %v1001, 4
          %v1013 = vsel %vm816, %v1012, %v983
          %v1014 = vrot.slane %v983, 4
          %v1015 = vsel %vm816, %v1001, %v1014
          %v1016 = vrot.slane %v1007, 4
          %v1017 = vsel %vm816, %v1016, %v989
          %v1018 = vrot.slane %v989, 4
          %v1019 = vsel %vm816, %v1007, %v1018
          %v1020 = vld [vmem:[%s1] sm:$0xff]
          %v1021 = vld [vmem:[#allocation7] sm:$0xff]
          %v1022 = vmul.f32 %v1009, %v1020
          %v1023 = vmul.f32 %v1011, %v1020
          %v1024 = vmul.f32 %v1013, %v1020
          %v1025 = vmul.f32 %v1015, %v1020
          %v1026 = vmul.f32 %v1017, %v1020
          %v1027 = vmul.f32 %v1019, %v1020
          %vm1028 = vcmask 1047616
          %1029 = vrot.lane.b32.xlu0 %v1009, 8
          %v1030 = vpop.permute.xlu0 %1029
          %v1031 = vsel %vm1028, %v1030, %v1009
          %1032 = vrot.lane.b32.xlu0 %v1011, 8
          %v1033 = vpop.permute.xlu0 %1032
          %v1034 = vsel %vm1028, %v1033, %v1011
          %1035 = vrot.lane.b32.xlu0 %v1013, 8
          %v1036 = vpop.permute.xlu0 %1035
          %v1037 = vsel %vm1028, %v1036, %v1013
          %1038 = vrot.lane.b32.xlu0 %v1015, 8
          %v1039 = vpop.permute.xlu0 %1038
          %v1040 = vsel %vm1028, %v1039, %v1015
          %1041 = vrot.lane.b32.xlu0 %v1017, 8
          %v1042 = vpop.permute.xlu0 %1041
          %v1043 = vsel %vm1028, %v1042, %v1017
          %1044 = vrot.lane.b32.xlu0 %v1019, 8
          %v1045 = vpop.permute.xlu0 %1044
          %v1046 = vsel %vm1028, %v1045, %v1019
          %1047 = vrot.lane.b32.xlu0 %v1031, 8
          %v1048 = vpop.permute.xlu0 %1047
          %1049 = vrot.lane.b32.xlu0 %v1034, 8
          %v1050 = vpop.permute.xlu0 %1049
          %1051 = vrot.lane.b32.xlu0 %v1037, 8
          %v1052 = vpop.permute.xlu0 %1051
          %1053 = vrot.lane.b32.xlu0 %v1040, 8
          %v1054 = vpop.permute.xlu0 %1053
          %1055 = vrot.lane.b32.xlu0 %v1043, 8
          %v1056 = vpop.permute.xlu0 %1055
          %1057 = vrot.lane.b32.xlu0 %v1046, 8
          %v1058 = vpop.permute.xlu0 %1057
          %v1059 = vsel %vm1028, %v1048, %v1009
          %v1060 = vsel %vm1028, %v1050, %v1011
          %v1061 = vsel %vm1028, %v1052, %v1013
          %v1062 = vsel %vm1028, %v1054, %v1015
          %v1063 = vsel %vm1028, %v1056, %v1017
          %v1064 = vsel %vm1028, %v1058, %v1019
          %1066 = vrot.lane.b32.xlu0 %v1021, 4
          %v1067 = vpop.permute.xlu0 %1066
          %v1069 = vmul.f32 %v1059, %v1067
          %v1070 = vmul.f32 %v1060, %v1067
          %v1071 = vmul.f32 %v1061, %v1067
          %v1072 = vmul.f32 %v1062, %v1067
          %v1073 = vmul.f32 %v1063, %v1067
          %v1074 = vmul.f32 %v1064, %v1067
          %1081 = vrot.lane.b32.xlu0 %v1069, 124
          %v1082 = vpop.permute.xlu0 %1081
          %1083 = vrot.lane.b32.xlu0 %v1070, 124
          %v1084 = vpop.permute.xlu0 %1083
          %1085 = vrot.lane.b32.xlu0 %v1071, 124
          %v1086 = vpop.permute.xlu0 %1085
          %1087 = vrot.lane.b32.xlu0 %v1072, 124
          %v1088 = vpop.permute.xlu0 %1087
          %1089 = vrot.lane.b32.xlu0 %v1073, 124
          %v1090 = vpop.permute.xlu0 %1089
          %1091 = vrot.lane.b32.xlu0 %v1074, 124
          %v1092 = vpop.permute.xlu0 %1091
          %v1099 = vadd.f32 %v1022, %v1082
          %v1100 = vadd.f32 %v1023, %v1084
          %v1101 = vadd.f32 %v1024, %v1086
          %v1102 = vadd.f32 %v1025, %v1088
          %v1103 = vadd.f32 %v1026, %v1090
          %v1104 = vadd.f32 %v1027, %v1092
          %v1105 = vpack.c.bf16 %v1099, %v1099
          %v1106 = vpack.c.bf16 %v1100, %v1100
          %v1107 = vpack.c.bf16 %v1101, %v1101
          %v1108 = vpack.c.bf16 %v1102, %v1102
          %v1109 = vpack.c.bf16 %v1103, %v1103
          %v1110 = vpack.c.bf16 %v1104, %v1104
          %vm1111 = vcmask 60416
          %1112 = vst.msk [vmem:[#allocation2] sm:$0xf] %vm1111, %v1105
          %1113 = vst.msk [vmem:[#allocation2 + $0x4] sm:$0xf] %vm1111, %v1106
          %1114 = vst.msk [vmem:[#allocation2 + $0x8] sm:$0xf] %vm1111, %v1107
          %1115 = vst.msk [vmem:[#allocation2 + $0xc] sm:$0xf] %vm1111, %v1108
          %1116 = vst.msk [vmem:[#allocation2 + $0x10] sm:$0xf] %vm1111, %v1109
          %1117 = vst.msk [vmem:[#allocation2 + $0x14] sm:$0xf] %vm1111, %v1110
          %1119 = vrot.lane.b32.xlu0 %v796, 120
          %v1120 = vpop.permute.xlu0 %1119
          %1122 = vrot.lane.b32.xlu0 %v796, 112
          %v1123 = vpop.permute.xlu0 %1122
          %1125 = vrot.lane.b32.xlu0 %v796, 104
          %v1126 = vpop.permute.xlu0 %1125
          %1128 = vrot.lane.b32.xlu0 %v796, 96
          %v1129 = vpop.permute.xlu0 %1128
          %1131 = vrot.lane.b32.xlu0 %v796, 88
          %v1132 = vpop.permute.xlu0 %1131
          %v1134 = vrot.slane %v1123, 4
          %v1135 = vsel %vm816, %v1134, %v796
          %v1136 = vrot.slane %v796, 4
          %v1137 = vsel %vm816, %v1123, %v1136
          %v1139 = vunpack.c.l.s4 1983009808
          %v1140 = vunpack.c.0.s8 %v1139
          %v1141 = vperm.slane %v1135, %v1140
          %v1143 = vunpack.c.l.s4 1983009808
          %v1144 = vunpack.c.0.s8 %v1143
          %v1145 = vperm.slane %v1137, %v1144
          %v1146 = vrot.slane %v1126, 4
          %v1147 = vsel %vm816, %v1146, %v1120
          %v1148 = vrot.slane %v1120, 4
          %v1149 = vsel %vm816, %v1126, %v1148
          %v1151 = vunpack.c.l.s4 1983009808
          %v1152 = vunpack.c.0.s8 %v1151
          %v1153 = vperm.slane %v1147, %v1152
          %v1155 = vunpack.c.l.s4 1983009808
          %v1156 = vunpack.c.0.s8 %v1155
          %v1157 = vperm.slane %v1149, %v1156
          %v1158 = vrot.slane %v1129, 4
          %v1159 = vsel %vm816, 0.0, %v1158
          %v1161 = vunpack.c.l.s4 1983009808
          %v1162 = vunpack.c.0.s8 %v1161
          %v1163 = vperm.slane %v1129, %v1162
          %v1165 = vunpack.c.l.s4 1983009808
          %v1166 = vunpack.c.0.s8 %v1165
          %v1167 = vperm.slane %v1159, %v1166
          %v1168 = vrot.slane %v1132, 4
          %v1169 = vsel %vm816, 0.0, %v1168
          %v1171 = vunpack.c.l.s4 1983009808
          %v1172 = vunpack.c.0.s8 %v1171
          %v1173 = vperm.slane %v1132, %v1172
          %v1175 = vunpack.c.l.s4 1983009808
          %v1176 = vunpack.c.0.s8 %v1175
          %v1177 = vperm.slane %v1169, %v1176
          %v1178 = vrot.slane %v1153, 4
          %v1179 = vsel %vm816, %v1178, %v1141
          %v1180 = vrot.slane %v1141, 4
          %v1181 = vsel %vm816, %v1153, %v1180
          %v1183 = vunpack.c.l.s4 1934713408
          %v1184 = vunpack.c.0.s8 %v1183
          %v1185 = vperm.slane %v1179, %v1184
          %v1187 = vunpack.c.l.s4 1934713408
          %v1188 = vunpack.c.0.s8 %v1187
          %v1189 = vperm.slane %v1181, %v1188
          %v1190 = vrot.slane %v1157, 4
          %v1191 = vsel %vm816, %v1190, %v1145
          %v1192 = vrot.slane %v1145, 4
          %v1193 = vsel %vm816, %v1157, %v1192
          %v1195 = vunpack.c.l.s4 1934713408
          %v1196 = vunpack.c.0.s8 %v1195
          %v1197 = vperm.slane %v1191, %v1196
          %v1199 = vunpack.c.l.s4 1934713408
          %v1200 = vunpack.c.0.s8 %v1199
          %v1201 = vperm.slane %v1193, %v1200
          %v1202 = vrot.slane %v1173, 4
          %v1203 = vsel %vm816, %v1202, %v1163
          %v1204 = vrot.slane %v1163, 4
          %v1205 = vsel %vm816, %v1173, %v1204
          %v1207 = vunpack.c.l.s4 1934713408
          %v1208 = vunpack.c.0.s8 %v1207
          %v1209 = vperm.slane %v1203, %v1208
          %v1211 = vunpack.c.l.s4 1934713408
          %v1212 = vunpack.c.0.s8 %v1211
          %v1213 = vperm.slane %v1205, %v1212
          %v1214 = vrot.slane %v1177, 4
          %v1215 = vsel %vm816, %v1214, %v1167
          %v1216 = vrot.slane %v1167, 4
          %v1217 = vsel %vm816, %v1177, %v1216
          %v1219 = vunpack.c.l.s4 1934713408
          %v1220 = vunpack.c.0.s8 %v1219
          %v1221 = vperm.slane %v1215, %v1220
          %v1223 = vunpack.c.l.s4 1934713408
          %v1224 = vunpack.c.0.s8 %v1223
          %v1225 = vperm.slane %v1217, %v1224
          %v1226 = vrot.slane %v1209, 4
          %v1227 = vsel %vm816, %v1226, %v1185
          %v1228 = vrot.slane %v1185, 4
          %v1229 = vsel %vm816, %v1209, %v1228
          %v1230 = vrot.slane %v1213, 4
          %v1231 = vsel %vm816, %v1230, %v1189
          %v1232 = vrot.slane %v1189, 4
          %v1233 = vsel %vm816, %v1213, %v1232
          %v1234 = vrot.slane %v1221, 4
          %v1235 = vsel %vm816, %v1234, %v1197
          %v1236 = vrot.slane %v1197, 4
          %v1237 = vsel %vm816, %v1221, %v1236
          %v1238 = vrot.slane %v1225, 4
          %v1239 = vsel %vm816, %v1238, %v1201
          %v1240 = vrot.slane %v1201, 4
          %v1241 = vsel %vm816, %v1225, %v1240
          %v1242 = vrot.slane %v1231, 4
          %v1243 = vsel %vm816, %v1242, %v1227
          %v1244 = vrot.slane %v1227, 4
          %v1245 = vsel %vm816, %v1231, %v1244
          %v1247 = vunpack.c.l.s4 1983009808
          %v1248 = vunpack.c.0.s8 %v1247
          %v1249 = vperm.slane %v1243, %v1248
          %v1251 = vunpack.c.l.s4 1983009808
          %v1252 = vunpack.c.0.s8 %v1251
          %v1253 = vperm.slane %v1245, %v1252
          %v1254 = vrot.slane %v1233, 4
          %v1255 = vsel %vm816, %v1254, %v1229
          %v1256 = vrot.slane %v1229, 4
          %v1257 = vsel %vm816, %v1233, %v1256
          %v1259 = vunpack.c.l.s4 1983009808
          %v1260 = vunpack.c.0.s8 %v1259
          %v1261 = vperm.slane %v1255, %v1260
          %v1263 = vunpack.c.l.s4 1983009808
          %v1264 = vunpack.c.0.s8 %v1263
          %v1265 = vperm.slane %v1257, %v1264
          %v1266 = vrot.slane %v1239, 4
          %v1267 = vsel %vm816, %v1266, %v1235
          %v1268 = vrot.slane %v1235, 4
          %v1269 = vsel %vm816, %v1239, %v1268
          %v1271 = vunpack.c.l.s4 1983009808
          %v1272 = vunpack.c.0.s8 %v1271
          %v1273 = vperm.slane %v1267, %v1272
          %v1275 = vunpack.c.l.s4 1983009808
          %v1276 = vunpack.c.0.s8 %v1275
          %v1277 = vperm.slane %v1269, %v1276
          %v1278 = vrot.slane %v1241, 4
          %v1279 = vsel %vm816, %v1278, %v1237
          %v1280 = vrot.slane %v1237, 4
          %v1281 = vsel %vm816, %v1241, %v1280
          %v1283 = vunpack.c.l.s4 1983009808
          %v1284 = vunpack.c.0.s8 %v1283
          %v1285 = vperm.slane %v1279, %v1284
          %v1287 = vunpack.c.l.s4 1983009808
          %v1288 = vunpack.c.0.s8 %v1287
          %v1289 = vperm.slane %v1281, %v1288
          %v1290 = vrot.slane %v1261, 4
          %v1291 = vsel %vm816, %v1290, %v1249
          %v1292 = vrot.slane %v1249, 4
          %v1293 = vsel %vm816, %v1261, %v1292
          %v1295 = vunpack.c.l.s4 1934713408
          %v1296 = vunpack.c.0.s8 %v1295
          %v1297 = vperm.slane %v1291, %v1296
          %v1299 = vunpack.c.l.s4 1934713408
          %v1300 = vunpack.c.0.s8 %v1299
          %v1301 = vperm.slane %v1293, %v1300
          %v1302 = vrot.slane %v1265, 4
          %v1303 = vsel %vm816, %v1302, %v1253
          %v1305 = vunpack.c.l.s4 1934713408
          %v1306 = vunpack.c.0.s8 %v1305
          %v1307 = vperm.slane %v1303, %v1306
          %v1308 = vrot.slane %v1285, 4
          %v1309 = vsel %vm816, %v1308, %v1273
          %v1310 = vrot.slane %v1273, 4
          %v1311 = vsel %vm816, %v1285, %v1310
          %v1313 = vunpack.c.l.s4 1934713408
          %v1314 = vunpack.c.0.s8 %v1313
          %v1315 = vperm.slane %v1309, %v1314
          %v1317 = vunpack.c.l.s4 1934713408
          %v1318 = vunpack.c.0.s8 %v1317
          %v1319 = vperm.slane %v1311, %v1318
          %v1320 = vrot.slane %v1289, 4
          %v1321 = vsel %vm816, %v1320, %v1277
          %v1323 = vunpack.c.l.s4 1934713408
          %v1324 = vunpack.c.0.s8 %v1323
          %v1325 = vperm.slane %v1321, %v1324
          %v1326 = vrot.slane %v1315, 4
          %v1327 = vsel %vm816, %v1326, %v1297
          %v1328 = vrot.slane %v1297, 4
          %v1329 = vsel %vm816, %v1315, %v1328
          %v1330 = vrot.slane %v1319, 4
          %v1331 = vsel %vm816, %v1330, %v1301
          %v1332 = vrot.slane %v1301, 4
          %v1333 = vsel %vm816, %v1319, %v1332
          %v1334 = vrot.slane %v1325, 4
          %v1335 = vsel %vm816, %v1334, %v1307
          %v1336 = vrot.slane %v1307, 4
          %v1337 = vsel %vm816, %v1325, %v1336
          %v1338 = vpack.c.bf16 %v1327, %v1327
          %v1339 = vpack.c.bf16 %v1329, %v1329
          %v1340 = vpack.c.bf16 %v1331, %v1331
          %v1341 = vpack.c.bf16 %v1333, %v1333
          %v1342 = vpack.c.bf16 %v1335, %v1335
          %v1343 = vpack.c.bf16 %v1337, %v1337
          %1344 = vst.msk [vmem:[#allocation3] sm:$0xf] %vm1111, %v1338
          %1345 = vst.msk [vmem:[#allocation3 + $0x4] sm:$0xf] %vm1111, %v1339
          %1346 = vst.msk [vmem:[#allocation3 + $0x8] sm:$0xf] %vm1111, %v1340
          %1347 = vst.msk [vmem:[#allocation3 + $0xc] sm:$0xf] %vm1111, %v1341
          %1348 = vst.msk [vmem:[#allocation3 + $0x10] sm:$0xf] %vm1111, %v1342
          %1349 = vst.msk [vmem:[#allocation3 + $0x14] sm:$0xf] %vm1111, %v1343
        $region104: #{tpu_custom_call.1} parent=87 // pred_fallthru
          _
        %s1350 = smul.u32 %s40, 8
        %s1351 = scalar_lea.vmem %s547, %s1350 [#allocation4]
        %v1352 = vld [vmem:[%s1351] sm:$0xff]
        %v1353 = vld [vmem:[%s3] sm:$0x1]
        %v1354 = vmul.f32 %v1352, %v1352
        %1355 = vadd.xlane.f32.xlu0 %v1354
        %v1356 = vpop.xlane.xlu0 %1355
        %v1357 = vmul.f32 %v1356, 0.020833334
        %v1358 = vadd.f32 %v1357, 1e-06
        %v1359 = vrsqrt.pop %v1358
        %v1360 = vmul.f32 %v1359, %v1358
        %v1361 = vmul.f32 %v1360, %v1359
        %v1362 = vmul.f32 0.5, %v1361
        %v1363 = vsub.f32 1.5, %v1362
        %v1364 = vmul.f32 %v1359, %v1363
        %vm1365 = vweird.f32 %v1358
        %vm1366 = vweird.f32 %v1359
        %vm1367 = vmor %vm1365, %vm1366
        %v1368 = vsel %vm1367, %v1359, %v1364
        %v1369 = vmul.f32 %v1352, %v1368
        %v1371 = vperm.slane %v1353, 0
        %v1373 = vmul.f32 %v1369, %v1371
        %v1374 = vpack.c.bf16 %v1373, %v1373
        %v1375 = vld [vmem:[%s5] sm:$0xf]
        %v1376 = vld [vmem:[%s5 + $0x4] sm:$0xf]
        %v1377 = vld [vmem:[%s5 + $0x8] sm:$0xf]
        %v1378 = vld [vmem:[%s5 + $0xc] sm:$0xf]
        %v1379 = vld [vmem:[%s5 + $0x10] sm:$0xf]
        %v1380 = vld [vmem:[%s5 + $0x14] sm:$0xf]
        %v1381 = vld [vmem:[%s5 + $0x18] sm:$0xf]
        %v1382 = vld [vmem:[%s5 + $0x1c] sm:$0xf]
        %v1383 = vld [vmem:[%s5 + $0x20] sm:$0xf]
        %v1384 = vld [vmem:[%s5 + $0x24] sm:$0xf]
        %v1385 = vld [vmem:[%s5 + $0x28] sm:$0xf]
        %v1386 = vld [vmem:[%s5 + $0x2c] sm:$0xf]
        %v1387 = vld [vmem:[%s5 + $0x30] sm:$0xf]
        %v1388 = vld [vmem:[%s5 + $0x34] sm:$0xf]
        %v1389 = vld [vmem:[%s5 + $0x38] sm:$0xf]
        %v1390 = vld [vmem:[%s5 + $0x3c] sm:$0xf]
        %v1391 = vld [vmem:[#allocation9] sm:$0x1]
        %v1393 = vperm.slane %v1391, 0
        %v1411 = vunpack.c.l.b16 %v1375
        %v1412 = vunpack.c.l.b16 %v1376
        %v1413 = vunpack.c.l.b16 %v1377
        %v1414 = vunpack.c.l.b16 %v1378
        %v1415 = vunpack.c.l.b16 %v1379
        %v1416 = vunpack.c.l.b16 %v1380
        %v1417 = vunpack.c.l.b16 %v1381
        %v1418 = vunpack.c.l.b16 %v1382
        %v1419 = vunpack.c.l.b16 %v1383
        %v1420 = vunpack.c.l.b16 %v1384
        %v1421 = vunpack.c.l.b16 %v1385
        %v1422 = vunpack.c.l.b16 %v1386
        %v1423 = vunpack.c.l.b16 %v1387
        %v1424 = vunpack.c.l.b16 %v1388
        %v1425 = vunpack.c.l.b16 %v1389
        %v1426 = vunpack.c.l.b16 %v1390
        %v1427 = vpack.c.b16 %v1412, %v1411
        %v1428 = vpack.c.b16 %v1414, %v1413
        %v1429 = vpack.c.b16 %v1416, %v1415
        %v1430 = vpack.c.b16 %v1418, %v1417
        %v1431 = vpack.c.b16 %v1420, %v1419
        %v1432 = vpack.c.b16 %v1422, %v1421
        %v1433 = vpack.c.b16 %v1424, %v1423
        %v1434 = vpack.c.b16 %v1426, %v1425
        %1443 = vmatpush.bf16.msra.mxu0 %v1434
        %1444 = vmatpush.bf16.msra.mxu0 %v1433
        %1445 = vmatpush.bf16.msra.mxu0 %v1432
        %1446 = vmatpush.bf16.msra.mxu0 %v1431
        %1447 = vmatpush.bf16.msra.mxu0 %v1430
        %1448 = vmatpush.bf16.msra.mxu0 %v1429
        %1449 = vmatpush.bf16.msra.mxu0 %v1428
        %1450 = vmatpush.bf16.msra.mxu0 %v1427
        %1451 = vmatmul.bf16.gmra.mxu0 %v1374
        %v1452 = vpop.f32.mrf.mxu0
        %v1453 = vadd.f32 %v1393, %v1452
        %v1454 = vpop.f32.mrf.mxu0
        %1455 = vdwg.mxu0
        %1457 = vrot.lane.b32.xlu0 %v1453, 120
        %v1458 = vpop.permute.xlu0 %1457
        %1460 = vrot.lane.b32.xlu0 %v1453, 112
        %v1461 = vpop.permute.xlu0 %1460
        %1463 = vrot.lane.b32.xlu0 %v1453, 104
        %v1464 = vpop.permute.xlu0 %1463
        %1466 = vrot.lane.b32.xlu0 %v1453, 96
        %v1467 = vpop.permute.xlu0 %1466
        %1469 = vrot.lane.b32.xlu0 %v1453, 88
        %v1470 = vpop.permute.xlu0 %1469
        %v1472 = vrot.slane %v1461, 4
        %vm1473 = vcmask 1047556
        %v1474 = vsel %vm1473, %v1472, %v1453
        %v1475 = vrot.slane %v1453, 4
        %v1476 = vsel %vm1473, %v1461, %v1475
        %v1478 = vunpack.c.l.s4 1983009808
        %v1479 = vunpack.c.0.s8 %v1478
        %v1480 = vperm.slane %v1474, %v1479
        %v1482 = vunpack.c.l.s4 1983009808
        %v1483 = vunpack.c.0.s8 %v1482
        %v1484 = vperm.slane %v1476, %v1483
        %v1485 = vrot.slane %v1464, 4
        %v1486 = vsel %vm1473, %v1485, %v1458
        %v1487 = vrot.slane %v1458, 4
        %v1488 = vsel %vm1473, %v1464, %v1487
        %v1490 = vunpack.c.l.s4 1983009808
        %v1491 = vunpack.c.0.s8 %v1490
        %v1492 = vperm.slane %v1486, %v1491
        %v1494 = vunpack.c.l.s4 1983009808
        %v1495 = vunpack.c.0.s8 %v1494
        %v1496 = vperm.slane %v1488, %v1495
        %v1497 = vrot.slane %v1467, 4
        %v1498 = vsel %vm1473, 0.0, %v1497
        %v1500 = vunpack.c.l.s4 1983009808
        %v1501 = vunpack.c.0.s8 %v1500
        %v1502 = vperm.slane %v1467, %v1501
        %v1504 = vunpack.c.l.s4 1983009808
        %v1505 = vunpack.c.0.s8 %v1504
        %v1506 = vperm.slane %v1498, %v1505
        %v1507 = vrot.slane %v1470, 4
        %v1508 = vsel %vm1473, 0.0, %v1507
        %v1510 = vunpack.c.l.s4 1983009808
        %v1511 = vunpack.c.0.s8 %v1510
        %v1512 = vperm.slane %v1470, %v1511
        %v1514 = vunpack.c.l.s4 1983009808
        %v1515 = vunpack.c.0.s8 %v1514
        %v1516 = vperm.slane %v1508, %v1515
        %v1517 = vrot.slane %v1492, 4
        %v1518 = vsel %vm1473, %v1517, %v1480
        %v1519 = vrot.slane %v1480, 4
        %v1520 = vsel %vm1473, %v1492, %v1519
        %v1522 = vunpack.c.l.s4 1934713408
        %v1523 = vunpack.c.0.s8 %v1522
        %v1524 = vperm.slane %v1518, %v1523
        %v1526 = vunpack.c.l.s4 1934713408
        %v1527 = vunpack.c.0.s8 %v1526
        %v1528 = vperm.slane %v1520, %v1527
        %v1529 = vrot.slane %v1496, 4
        %v1530 = vsel %vm1473, %v1529, %v1484
        %v1531 = vrot.slane %v1484, 4
        %v1532 = vsel %vm1473, %v1496, %v1531
        %v1534 = vunpack.c.l.s4 1934713408
        %v1535 = vunpack.c.0.s8 %v1534
        %v1536 = vperm.slane %v1530, %v1535
        %v1538 = vunpack.c.l.s4 1934713408
        %v1539 = vunpack.c.0.s8 %v1538
        %v1540 = vperm.slane %v1532, %v1539
        %v1541 = vrot.slane %v1512, 4
        %v1542 = vsel %vm1473, %v1541, %v1502
        %v1543 = vrot.slane %v1502, 4
        %v1544 = vsel %vm1473, %v1512, %v1543
        %v1546 = vunpack.c.l.s4 1934713408
        %v1547 = vunpack.c.0.s8 %v1546
        %v1548 = vperm.slane %v1542, %v1547
        %v1550 = vunpack.c.l.s4 1934713408
        %v1551 = vunpack.c.0.s8 %v1550
        %v1552 = vperm.slane %v1544, %v1551
        %v1553 = vrot.slane %v1516, 4
        %v1554 = vsel %vm1473, %v1553, %v1506
        %v1555 = vrot.slane %v1506, 4
        %v1556 = vsel %vm1473, %v1516, %v1555
        %v1558 = vunpack.c.l.s4 1934713408
        %v1559 = vunpack.c.0.s8 %v1558
        %v1560 = vperm.slane %v1554, %v1559
        %v1562 = vunpack.c.l.s4 1934713408
        %v1563 = vunpack.c.0.s8 %v1562
        %v1564 = vperm.slane %v1556, %v1563
        %v1565 = vrot.slane %v1548, 4
        %v1566 = vsel %vm1473, %v1565, %v1524
        %v1567 = vrot.slane %v1524, 4
        %v1568 = vsel %vm1473, %v1548, %v1567
        %v1569 = vrot.slane %v1552, 4
        %v1570 = vsel %vm1473, %v1569, %v1528
        %v1571 = vrot.slane %v1528, 4
        %v1572 = vsel %vm1473, %v1552, %v1571
        %v1573 = vrot.slane %v1560, 4
        %v1574 = vsel %vm1473, %v1573, %v1536
        %v1575 = vrot.slane %v1536, 4
        %v1576 = vsel %vm1473, %v1560, %v1575
        %v1577 = vrot.slane %v1564, 4
        %v1578 = vsel %vm1473, %v1577, %v1540
        %v1579 = vrot.slane %v1540, 4
        %v1580 = vsel %vm1473, %v1564, %v1579
        %v1581 = vrot.slane %v1570, 4
        %v1582 = vsel %vm1473, %v1581, %v1566
        %v1583 = vrot.slane %v1566, 4
        %v1584 = vsel %vm1473, %v1570, %v1583
        %v1586 = vunpack.c.l.s4 1983009808
        %v1587 = vunpack.c.0.s8 %v1586
        %v1588 = vperm.slane %v1582, %v1587
        %v1590 = vunpack.c.l.s4 1983009808
        %v1591 = vunpack.c.0.s8 %v1590
        %v1592 = vperm.slane %v1584, %v1591
        %v1593 = vrot.slane %v1572, 4
        %v1594 = vsel %vm1473, %v1593, %v1568
        %v1595 = vrot.slane %v1568, 4
        %v1596 = vsel %vm1473, %v1572, %v1595
        %v1598 = vunpack.c.l.s4 1983009808
        %v1599 = vunpack.c.0.s8 %v1598
        %v1600 = vperm.slane %v1594, %v1599
        %v1602 = vunpack.c.l.s4 1983009808
        %v1603 = vunpack.c.0.s8 %v1602
        %v1604 = vperm.slane %v1596, %v1603
        %v1605 = vrot.slane %v1578, 4
        %v1606 = vsel %vm1473, %v1605, %v1574
        %v1607 = vrot.slane %v1574, 4
        %v1608 = vsel %vm1473, %v1578, %v1607
        %v1610 = vunpack.c.l.s4 1983009808
        %v1611 = vunpack.c.0.s8 %v1610
        %v1612 = vperm.slane %v1606, %v1611
        %v1614 = vunpack.c.l.s4 1983009808
        %v1615 = vunpack.c.0.s8 %v1614
        %v1616 = vperm.slane %v1608, %v1615
        %v1617 = vrot.slane %v1580, 4
        %v1618 = vsel %vm1473, %v1617, %v1576
        %v1619 = vrot.slane %v1576, 4
        %v1620 = vsel %vm1473, %v1580, %v1619
        %v1622 = vunpack.c.l.s4 1983009808
        %v1623 = vunpack.c.0.s8 %v1622
        %v1624 = vperm.slane %v1618, %v1623
        %v1626 = vunpack.c.l.s4 1983009808
        %v1627 = vunpack.c.0.s8 %v1626
        %v1628 = vperm.slane %v1620, %v1627
        %v1629 = vrot.slane %v1600, 4
        %v1630 = vsel %vm1473, %v1629, %v1588
        %v1631 = vrot.slane %v1588, 4
        %v1632 = vsel %vm1473, %v1600, %v1631
        %v1634 = vunpack.c.l.s4 1934713408
        %v1635 = vunpack.c.0.s8 %v1634
        %v1636 = vperm.slane %v1630, %v1635
        %v1638 = vunpack.c.l.s4 1934713408
        %v1639 = vunpack.c.0.s8 %v1638
        %v1640 = vperm.slane %v1632, %v1639
        %v1641 = vrot.slane %v1604, 4
        %v1642 = vsel %vm1473, %v1641, %v1592
        %v1644 = vunpack.c.l.s4 1934713408
        %v1645 = vunpack.c.0.s8 %v1644
        %v1646 = vperm.slane %v1642, %v1645
        %v1647 = vrot.slane %v1624, 4
        %v1648 = vsel %vm1473, %v1647, %v1612
        %v1649 = vrot.slane %v1612, 4
        %v1650 = vsel %vm1473, %v1624, %v1649
        %v1652 = vunpack.c.l.s4 1934713408
        %v1653 = vunpack.c.0.s8 %v1652
        %v1654 = vperm.slane %v1648, %v1653
        %v1656 = vunpack.c.l.s4 1934713408
        %v1657 = vunpack.c.0.s8 %v1656
        %v1658 = vperm.slane %v1650, %v1657
        %v1659 = vrot.slane %v1628, 4
        %v1660 = vsel %vm1473, %v1659, %v1616
        %v1662 = vunpack.c.l.s4 1934713408
        %v1663 = vunpack.c.0.s8 %v1662
        %v1664 = vperm.slane %v1660, %v1663
        %v1665 = vrot.slane %v1654, 4
        %v1666 = vsel %vm1473, %v1665, %v1636
        %v1667 = vrot.slane %v1636, 4
        %v1668 = vsel %vm1473, %v1654, %v1667
        %v1669 = vrot.slane %v1658, 4
        %v1670 = vsel %vm1473, %v1669, %v1640
        %v1671 = vrot.slane %v1640, 4
        %v1672 = vsel %vm1473, %v1658, %v1671
        %v1673 = vrot.slane %v1664, 4
        %v1674 = vsel %vm1473, %v1673, %v1646
        %v1675 = vrot.slane %v1646, 4
        %v1676 = vsel %vm1473, %v1664, %v1675
        %s1677 = scalar_lea.vmem %s1, %s1350
        %v1678 = vld [vmem:[%s1677] sm:$0xff]
        %s1679 = scalar_lea.vmem [#allocation7], %s1350
        %v1680 = vld [vmem:[%s1679] sm:$0xff]
        %v1681 = vmul.f32 %v1666, %v1678
        %v1682 = vmul.f32 %v1668, %v1678
        %v1683 = vmul.f32 %v1670, %v1678
        %v1684 = vmul.f32 %v1672, %v1678
        %v1685 = vmul.f32 %v1674, %v1678
        %v1686 = vmul.f32 %v1676, %v1678
        %vm1687 = vcmask 1047616
        %1688 = vrot.lane.b32.xlu0 %v1666, 8
        %v1689 = vpop.permute.xlu0 %1688
        %v1690 = vsel %vm1687, %v1689, %v1666
        %1691 = vrot.lane.b32.xlu0 %v1668, 8
        %v1692 = vpop.permute.xlu0 %1691
        %v1693 = vsel %vm1687, %v1692, %v1668
        %1694 = vrot.lane.b32.xlu0 %v1670, 8
        %v1695 = vpop.permute.xlu0 %1694
        %v1696 = vsel %vm1687, %v1695, %v1670
        %1697 = vrot.lane.b32.xlu0 %v1672, 8
        %v1698 = vpop.permute.xlu0 %1697
        %v1699 = vsel %vm1687, %v1698, %v1672
        %1700 = vrot.lane.b32.xlu0 %v1674, 8
        %v1701 = vpop.permute.xlu0 %1700
        %v1702 = vsel %vm1687, %v1701, %v1674
        %1703 = vrot.lane.b32.xlu0 %v1676, 8
        %v1704 = vpop.permute.xlu0 %1703
        %v1705 = vsel %vm1687, %v1704, %v1676
        %1706 = vrot.lane.b32.xlu0 %v1690, 8
        %v1707 = vpop.permute.xlu0 %1706
        %1708 = vrot.lane.b32.xlu0 %v1693, 8
        %v1709 = vpop.permute.xlu0 %1708
        %1710 = vrot.lane.b32.xlu0 %v1696, 8
        %v1711 = vpop.permute.xlu0 %1710
        %1712 = vrot.lane.b32.xlu0 %v1699, 8
        %v1713 = vpop.permute.xlu0 %1712
        %1714 = vrot.lane.b32.xlu0 %v1702, 8
        %v1715 = vpop.permute.xlu0 %1714
        %1716 = vrot.lane.b32.xlu0 %v1705, 8
        %v1717 = vpop.permute.xlu0 %1716
        %v1718 = vsel %vm1687, %v1707, %v1666
        %v1719 = vsel %vm1687, %v1709, %v1668
        %v1720 = vsel %vm1687, %v1711, %v1670
        %v1721 = vsel %vm1687, %v1713, %v1672
        %v1722 = vsel %vm1687, %v1715, %v1674
        %v1723 = vsel %vm1687, %v1717, %v1676
        %1725 = vrot.lane.b32.xlu0 %v1680, 4
        %v1726 = vpop.permute.xlu0 %1725
        %v1728 = vmul.f32 %v1718, %v1726
        %v1729 = vmul.f32 %v1719, %v1726
        %v1730 = vmul.f32 %v1720, %v1726
        %v1731 = vmul.f32 %v1721, %v1726
        %v1732 = vmul.f32 %v1722, %v1726
        %v1733 = vmul.f32 %v1723, %v1726
        %1740 = vrot.lane.b32.xlu0 %v1728, 124
        %v1741 = vpop.permute.xlu0 %1740
        %1742 = vrot.lane.b32.xlu0 %v1729, 124
        %v1743 = vpop.permute.xlu0 %1742
        %1744 = vrot.lane.b32.xlu0 %v1730, 124
        %v1745 = vpop.permute.xlu0 %1744
        %1746 = vrot.lane.b32.xlu0 %v1731, 124
        %v1747 = vpop.permute.xlu0 %1746
        %1748 = vrot.lane.b32.xlu0 %v1732, 124
        %v1749 = vpop.permute.xlu0 %1748
        %1750 = vrot.lane.b32.xlu0 %v1733, 124
        %v1751 = vpop.permute.xlu0 %1750
        %v1758 = vadd.f32 %v1681, %v1741
        %v1759 = vadd.f32 %v1682, %v1743
        %v1760 = vadd.f32 %v1683, %v1745
        %v1761 = vadd.f32 %v1684, %v1747
        %v1762 = vadd.f32 %v1685, %v1749
        %v1763 = vadd.f32 %v1686, %v1751
        %v1764 = vpack.c.bf16 %v1758, %v1758
        %v1765 = vpack.c.bf16 %v1759, %v1759
        %v1766 = vpack.c.bf16 %v1760, %v1760
        %v1767 = vpack.c.bf16 %v1761, %v1761
        %v1768 = vpack.c.bf16 %v1762, %v1762
        %v1769 = vpack.c.bf16 %v1763, %v1763
        %v1770 = vld [vmem:[#allocation2] sm:$0xf]
        %v1771 = vld [vmem:[#allocation2 + $0x4] sm:$0xf]
        %v1772 = vld [vmem:[#allocation2 + $0x8] sm:$0xf]
        %v1773 = vld [vmem:[#allocation2 + $0xc] sm:$0xf]
        %v1774 = vld [vmem:[#allocation2 + $0x10] sm:$0xf]
        %v1775 = vld [vmem:[#allocation2 + $0x14] sm:$0xf]
        %v1776 = vld [vmem:[#allocation3] sm:$0xf]
        %v1777 = vld [vmem:[#allocation3 + $0x4] sm:$0xf]
        %v1778 = vld [vmem:[#allocation3 + $0x8] sm:$0xf]
        %v1779 = vld [vmem:[#allocation3 + $0xc] sm:$0xf]
        %v1780 = vld [vmem:[#allocation3 + $0x10] sm:$0xf]
        %v1781 = vld [vmem:[#allocation3 + $0x14] sm:$0xf]
        %vm1782 = vcmask 64512
        %v1784 = vsel %vm1782, %v1764, 0
        %v1787 = vsel %vm1782, %v1770, 0
        %1789 = vmatpush.bf16.xpose.msra.mxu0 0
        %1790 = vmatpush.bf16.xpose.msra.mxu0 0
        %1791 = vmatpush.bf16.xpose.msra.mxu0 0
        %1792 = vmatpush.bf16.xpose.msra.mxu0 0
        %1793 = vmatpush.bf16.xpose.msra.mxu0 0
        %1794 = vmatpush.bf16.xpose.msra.mxu0 0
        %1795 = vmatpush.bf16.xpose.msra.mxu0 0
        %1796 = vmatpush.bf16.xpose.msra.mxu0 %v1787
        %1797 = vmatmul.bf16.gmra.mxu0 %v1784
        %v1798 = vpop.f32.mrf.mxu0
        %v1799 = vadd.f32 0.0, %v1798
        %v1800 = vpop.f32.mrf.mxu0
        %1801 = vdwg.mxu0
        %v1803 = vsel %vm1782, %v1765, 0
        %v1806 = vsel %vm1782, %v1771, 0
        %1808 = vmatpush.bf16.xpose.msra.mxu0 0
        %1809 = vmatpush.bf16.xpose.msra.mxu0 0
        %1810 = vmatpush.bf16.xpose.msra.mxu0 0
        %1811 = vmatpush.bf16.xpose.msra.mxu0 0
        %1812 = vmatpush.bf16.xpose.msra.mxu0 0
        %1813 = vmatpush.bf16.xpose.msra.mxu0 0
        %1814 = vmatpush.bf16.xpose.msra.mxu0 0
        %1815 = vmatpush.bf16.xpose.msra.mxu0 %v1806
        %1816 = vmatmul.bf16.gmra.mxu0 %v1803
        %v1817 = vpop.f32.mrf.mxu0
        %v1818 = vadd.f32 0.0, %v1817
        %v1819 = vpop.f32.mrf.mxu0
        %1820 = vdwg.mxu0
        %v1822 = vsel %vm1782, %v1766, 0
        %v1825 = vsel %vm1782, %v1772, 0
        %1827 = vmatpush.bf16.xpose.msra.mxu0 0
        %1828 = vmatpush.bf16.xpose.msra.mxu0 0
        %1829 = vmatpush.bf16.xpose.msra.mxu0 0
        %1830 = vmatpush.bf16.xpose.msra.mxu0 0
        %1831 = vmatpush.bf16.xpose.msra.mxu0 0
        %1832 = vmatpush.bf16.xpose.msra.mxu0 0
        %1833 = vmatpush.bf16.xpose.msra.mxu0 0
        %1834 = vmatpush.bf16.xpose.msra.mxu0 %v1825
        %1835 = vmatmul.bf16.gmra.mxu0 %v1822
        %v1836 = vpop.f32.mrf.mxu0
        %v1837 = vadd.f32 0.0, %v1836
        %v1838 = vpop.f32.mrf.mxu0
        %1839 = vdwg.mxu0
        %v1841 = vsel %vm1782, %v1767, 0
        %v1844 = vsel %vm1782, %v1773, 0
        %1846 = vmatpush.bf16.xpose.msra.mxu0 0
        %1847 = vmatpush.bf16.xpose.msra.mxu0 0
        %1848 = vmatpush.bf16.xpose.msra.mxu0 0
        %1849 = vmatpush.bf16.xpose.msra.mxu0 0
        %1850 = vmatpush.bf16.xpose.msra.mxu0 0
        %1851 = vmatpush.bf16.xpose.msra.mxu0 0
        %1852 = vmatpush.bf16.xpose.msra.mxu0 0
        %1853 = vmatpush.bf16.xpose.msra.mxu0 %v1844
        %1854 = vmatmul.bf16.gmra.mxu0 %v1841
        %v1855 = vpop.f32.mrf.mxu0
        %v1856 = vadd.f32 0.0, %v1855
        %v1857 = vpop.f32.mrf.mxu0
        %1858 = vdwg.mxu0
        %v1860 = vsel %vm1782, %v1768, 0
        %v1863 = vsel %vm1782, %v1774, 0
        %1865 = vmatpush.bf16.xpose.msra.mxu0 0
        %1866 = vmatpush.bf16.xpose.msra.mxu0 0
        %1867 = vmatpush.bf16.xpose.msra.mxu0 0
        %1868 = vmatpush.bf16.xpose.msra.mxu0 0
        %1869 = vmatpush.bf16.xpose.msra.mxu0 0
        %1870 = vmatpush.bf16.xpose.msra.mxu0 0
        %1871 = vmatpush.bf16.xpose.msra.mxu0 0
        %1872 = vmatpush.bf16.xpose.msra.mxu0 %v1863
        %1873 = vmatmul.bf16.gmra.mxu0 %v1860
        %v1874 = vpop.f32.mrf.mxu0
        %v1875 = vadd.f32 0.0, %v1874
        %v1876 = vpop.f32.mrf.mxu0
        %1877 = vdwg.mxu0
        %v1879 = vsel %vm1782, %v1769, 0
        %v1882 = vsel %vm1782, %v1775, 0
        %1884 = vmatpush.bf16.xpose.msra.mxu0 0
        %1885 = vmatpush.bf16.xpose.msra.mxu0 0
        %1886 = vmatpush.bf16.xpose.msra.mxu0 0
        %1887 = vmatpush.bf16.xpose.msra.mxu0 0
        %1888 = vmatpush.bf16.xpose.msra.mxu0 0
        %1889 = vmatpush.bf16.xpose.msra.mxu0 0
        %1890 = vmatpush.bf16.xpose.msra.mxu0 0
        %1891 = vmatpush.bf16.xpose.msra.mxu0 %v1882
        %1892 = vmatmul.bf16.gmra.mxu0 %v1879
        %v1893 = vpop.f32.mrf.mxu0
        %v1894 = vadd.f32 0.0, %v1893
        %v1895 = vpop.f32.mrf.mxu0
        %1896 = vdwg.mxu0
        %v1897 = vsel %vm1782, %v1799, -inf
        %1898 = vmax.xlane.f32.xlu0 %v1897
        %v1899 = vpop.xlane.xlu0 %1898
        %v1900 = vsel %vm1782, %v1818, -inf
        %1901 = vmax.xlane.f32.xlu0 %v1900
        %v1902 = vpop.xlane.xlu0 %1901
        %v1903 = vsel %vm1782, %v1837, -inf
        %1904 = vmax.xlane.f32.xlu0 %v1903
        %v1905 = vpop.xlane.xlu0 %1904
        %v1906 = vsel %vm1782, %v1856, -inf
        %1907 = vmax.xlane.f32.xlu0 %v1906
        %v1908 = vpop.xlane.xlu0 %1907
        %v1909 = vsel %vm1782, %v1875, -inf
        %1910 = vmax.xlane.f32.xlu0 %v1909
        %v1911 = vpop.xlane.xlu0 %1910
        %v1912 = vsel %vm1782, %v1894, -inf
        %1913 = vmax.xlane.f32.xlu0 %v1912
        %v1914 = vpop.xlane.xlu0 %1913
        %v1915 = vsub.f32 -inf, %v1899
        %v1916 = vsub.f32 -inf, %v1902
        %v1917 = vsub.f32 -inf, %v1905
        %v1918 = vsub.f32 -inf, %v1908
        %v1919 = vsub.f32 -inf, %v1911
        %v1920 = vsub.f32 -inf, %v1914
        %v1921 = vmul.f32 %v1915, 1.442695
        %v1922 = vpow.pop %v1921
        %v1923 = vmul.f32 %v1916, 1.442695
        %v1924 = vpow.pop %v1923
        %v1925 = vmul.f32 %v1917, 1.442695
        %v1926 = vpow.pop %v1925
        %v1927 = vmul.f32 %v1918, 1.442695
        %v1928 = vpow.pop %v1927
        %v1929 = vmul.f32 %v1919, 1.442695
        %v1930 = vpow.pop %v1929
        %v1931 = vmul.f32 %v1920, 1.442695
        %v1932 = vpow.pop %v1931
        %v1933 = vsub.f32 %v1799, %v1899
        %v1934 = vsub.f32 %v1818, %v1902
        %v1935 = vsub.f32 %v1837, %v1905
        %v1936 = vsub.f32 %v1856, %v1908
        %v1937 = vsub.f32 %v1875, %v1911
        %v1938 = vsub.f32 %v1894, %v1914
        %v1939 = vmul.f32 %v1933, 1.442695
        %v1940 = vpow.pop %v1939
        %v1941 = vmul.f32 %v1934, 1.442695
        %v1942 = vpow.pop %v1941
        %v1943 = vmul.f32 %v1935, 1.442695
        %v1944 = vpow.pop %v1943
        %v1945 = vmul.f32 %v1936, 1.442695
        %v1946 = vpow.pop %v1945
        %v1947 = vmul.f32 %v1937, 1.442695
        %v1948 = vpow.pop %v1947
        %v1949 = vmul.f32 %v1938, 1.442695
        %v1950 = vpow.pop %v1949
        %v1951 = vmul.f32 %v1922, 0.0
        %v1952 = vmul.f32 %v1924, 0.0
        %v1953 = vmul.f32 %v1926, 0.0
        %v1954 = vmul.f32 %v1928, 0.0
        %v1955 = vmul.f32 %v1930, 0.0
        %v1956 = vmul.f32 %v1932, 0.0
        %v1957 = vsel %vm1782, %v1940, 0.0
        %1958 = vadd.xlane.f32.xlu0 %v1957
        %v1959 = vpop.xlane.xlu0 %1958
        %v1960 = vsel %vm1782, %v1942, 0.0
        %1961 = vadd.xlane.f32.xlu0 %v1960
        %v1962 = vpop.xlane.xlu0 %1961
        %v1963 = vsel %vm1782, %v1944, 0.0
        %1964 = vadd.xlane.f32.xlu0 %v1963
        %v1965 = vpop.xlane.xlu0 %1964
        %v1966 = vsel %vm1782, %v1946, 0.0
        %1967 = vadd.xlane.f32.xlu0 %v1966
        %v1968 = vpop.xlane.xlu0 %1967
        %v1969 = vsel %vm1782, %v1948, 0.0
        %1970 = vadd.xlane.f32.xlu0 %v1969
        %v1971 = vpop.xlane.xlu0 %1970
        %v1972 = vsel %vm1782, %v1950, 0.0
        %1973 = vadd.xlane.f32.xlu0 %v1972
        %v1974 = vpop.xlane.xlu0 %1973
        %v1975 = vadd.f32 %v1951, %v1959
        %v1976 = vadd.f32 %v1952, %v1962
        %v1977 = vadd.f32 %v1953, %v1965
        %v1978 = vadd.f32 %v1954, %v1968
        %v1979 = vadd.f32 %v1955, %v1971
        %v1980 = vadd.f32 %v1956, %v1974
        %v1981 = vpack.c.bf16 %v1940, %v1940
        %v1982 = vpack.c.bf16 %v1942, %v1942
        %v1983 = vpack.c.bf16 %v1944, %v1944
        %v1984 = vpack.c.bf16 %v1946, %v1946
        %v1985 = vpack.c.bf16 %v1948, %v1948
        %v1986 = vpack.c.bf16 %v1950, %v1950
        %v1988 = vsel %vm1782, %v1981, 0
        %vm1990 = vcmask 1043456
        %v1992 = vsel %vm1990, %v1776, 0
        %1994 = vmatpush.bf16.msra.mxu0 0
        %1995 = vmatpush.bf16.msra.mxu0 0
        %1996 = vmatpush.bf16.msra.mxu0 0
        %1997 = vmatpush.bf16.msra.mxu0 0
        %1998 = vmatpush.bf16.msra.mxu0 0
        %1999 = vmatpush.bf16.msra.mxu0 0
        %2000 = vmatpush.bf16.msra.mxu0 0
        %2001 = vmatpush.bf16.msra.mxu0 %v1992
        %2002 = vmatmul.bf16.gmra.mxu0 %v1988
        %v2003 = vpop.f32.mrf.mxu0
        %v2004 = vadd.f32 0.0, %v2003
        %v2005 = vpop.f32.mrf.mxu0
        %2006 = vdwg.mxu0
        %v2008 = vsel %vm1782, %v1982, 0
        %v2011 = vsel %vm1990, %v1777, 0
        %2013 = vmatpush.bf16.msra.mxu0 0
        %2014 = vmatpush.bf16.msra.mxu0 0
        %2015 = vmatpush.bf16.msra.mxu0 0
        %2016 = vmatpush.bf16.msra.mxu0 0
        %2017 = vmatpush.bf16.msra.mxu0 0
        %2018 = vmatpush.bf16.msra.mxu0 0
        %2019 = vmatpush.bf16.msra.mxu0 0
        %2020 = vmatpush.bf16.msra.mxu0 %v2011
        %2021 = vmatmul.bf16.gmra.mxu0 %v2008
        %v2022 = vpop.f32.mrf.mxu0
        %v2023 = vadd.f32 0.0, %v2022
        %v2024 = vpop.f32.mrf.mxu0
        %2025 = vdwg.mxu0
        %v2027 = vsel %vm1782, %v1983, 0
        %v2030 = vsel %vm1990, %v1778, 0
        %2032 = vmatpush.bf16.msra.mxu0 0
        %2033 = vmatpush.bf16.msra.mxu0 0
        %2034 = vmatpush.bf16.msra.mxu0 0
        %2035 = vmatpush.bf16.msra.mxu0 0
        %2036 = vmatpush.bf16.msra.mxu0 0
        %2037 = vmatpush.bf16.msra.mxu0 0
        %2038 = vmatpush.bf16.msra.mxu0 0
        %2039 = vmatpush.bf16.msra.mxu0 %v2030
        %2040 = vmatmul.bf16.gmra.mxu0 %v2027
        %v2041 = vpop.f32.mrf.mxu0
        %v2042 = vadd.f32 0.0, %v2041
        %v2043 = vpop.f32.mrf.mxu0
        %2044 = vdwg.mxu0
        %v2046 = vsel %vm1782, %v1984, 0
        %v2049 = vsel %vm1990, %v1779, 0
        %2051 = vmatpush.bf16.msra.mxu0 0
        %2052 = vmatpush.bf16.msra.mxu0 0
        %2053 = vmatpush.bf16.msra.mxu0 0
        %2054 = vmatpush.bf16.msra.mxu0 0
        %2055 = vmatpush.bf16.msra.mxu0 0
        %2056 = vmatpush.bf16.msra.mxu0 0
        %2057 = vmatpush.bf16.msra.mxu0 0
        %2058 = vmatpush.bf16.msra.mxu0 %v2049
        %2059 = vmatmul.bf16.gmra.mxu0 %v2046
        %v2060 = vpop.f32.mrf.mxu0
        %v2061 = vadd.f32 0.0, %v2060
        %v2062 = vpop.f32.mrf.mxu0
        %2063 = vdwg.mxu0
        %v2065 = vsel %vm1782, %v1985, 0
        %v2068 = vsel %vm1990, %v1780, 0
        %2070 = vmatpush.bf16.msra.mxu0 0
        %2071 = vmatpush.bf16.msra.mxu0 0
        %2072 = vmatpush.bf16.msra.mxu0 0
        %2073 = vmatpush.bf16.msra.mxu0 0
        %2074 = vmatpush.bf16.msra.mxu0 0
        %2075 = vmatpush.bf16.msra.mxu0 0
        %2076 = vmatpush.bf16.msra.mxu0 0
        %2077 = vmatpush.bf16.msra.mxu0 %v2068
        %2078 = vmatmul.bf16.gmra.mxu0 %v2065
        %v2079 = vpop.f32.mrf.mxu0
        %v2080 = vadd.f32 0.0, %v2079
        %v2081 = vpop.f32.mrf.mxu0
        %2082 = vdwg.mxu0
        %v2084 = vsel %vm1782, %v1986, 0
        %v2087 = vsel %vm1990, %v1781, 0
        %2089 = vmatpush.bf16.msra.mxu0 0
        %2090 = vmatpush.bf16.msra.mxu0 0
        %2091 = vmatpush.bf16.msra.mxu0 0
        %2092 = vmatpush.bf16.msra.mxu0 0
        %2093 = vmatpush.bf16.msra.mxu0 0
        %2094 = vmatpush.bf16.msra.mxu0 0
        %2095 = vmatpush.bf16.msra.mxu0 0
        %2096 = vmatpush.bf16.msra.mxu0 %v2087
        %2097 = vmatmul.bf16.gmra.mxu0 %v2084
        %v2098 = vpop.f32.mrf.mxu0
        %v2099 = vadd.f32 0.0, %v2098
        %v2100 = vpop.f32.mrf.mxu0
        %2101 = vdwg.mxu0
        %v2102 = vadd.f32 %v1951, %v2004
        %v2103 = vadd.f32 %v1952, %v2023
        %v2104 = vadd.f32 %v1953, %v2042
        %v2105 = vadd.f32 %v1954, %v2061
        %v2106 = vadd.f32 %v1955, %v2080
        %v2107 = vadd.f32 %v1956, %v2099
        %v2108 = vrcp.pop %v1975
        %v2109 = vmul.f32 %v1975, %v2108
        %v2110 = vsub.f32 1.0, %v2109
        %v2111 = vmul.f32 %v2108, %v2110
        %v2112 = vadd.f32 %v2108, %v2111
        %vm2113 = vweird.f32 %v1975
        %vm2114 = vweird.f32 %v2108
        %vm2115 = vmor %vm2113, %vm2114
        %v2116 = vsel %vm2115, %v2108, %v2112
        %v2117 = vand.u32 2147483647, %v1975
        %vm2118 = vcmp.eq.f32.partialorder %v2117, 8.507059e+37
        %v2119 = vand.u32 %v1975, 2147483648
        %v2120 = vor.u32 1.1754944e-38, %v2119
        %v2121 = vsel %vm2118, %v2120, %v2116
        %v2122 = vmul.f32 %v2102, %v2121
        %v2123 = vrcp.pop %v1976
        %v2124 = vmul.f32 %v1976, %v2123
        %v2125 = vsub.f32 1.0, %v2124
        %v2126 = vmul.f32 %v2123, %v2125
        %v2127 = vadd.f32 %v2123, %v2126
        %vm2128 = vweird.f32 %v1976
        %vm2129 = vweird.f32 %v2123
        %vm2130 = vmor %vm2128, %vm2129
        %v2131 = vsel %vm2130, %v2123, %v2127
        %v2132 = vand.u32 2147483647, %v1976
        %vm2133 = vcmp.eq.f32.partialorder %v2132, 8.507059e+37
        %v2134 = vand.u32 %v1976, 2147483648
        %v2135 = vor.u32 1.1754944e-38, %v2134
        %v2136 = vsel %vm2133, %v2135, %v2131
        %v2137 = vmul.f32 %v2103, %v2136
        %v2138 = vrcp.pop %v1977
        %v2139 = vmul.f32 %v1977, %v2138
        %v2140 = vsub.f32 1.0, %v2139
        %v2141 = vmul.f32 %v2138, %v2140
        %v2142 = vadd.f32 %v2138, %v2141
        %vm2143 = vweird.f32 %v1977
        %vm2144 = vweird.f32 %v2138
        %vm2145 = vmor %vm2143, %vm2144
        %v2146 = vsel %vm2145, %v2138, %v2142
        %v2147 = vand.u32 2147483647, %v1977
        %vm2148 = vcmp.eq.f32.partialorder %v2147, 8.507059e+37
        %v2149 = vand.u32 %v1977, 2147483648
        %v2150 = vor.u32 1.1754944e-38, %v2149
        %v2151 = vsel %vm2148, %v2150, %v2146
        %v2152 = vmul.f32 %v2104, %v2151
        %v2153 = vrcp.pop %v1978
        %v2154 = vmul.f32 %v1978, %v2153
        %v2155 = vsub.f32 1.0, %v2154
        %v2156 = vmul.f32 %v2153, %v2155
        %v2157 = vadd.f32 %v2153, %v2156
        %vm2158 = vweird.f32 %v1978
        %vm2159 = vweird.f32 %v2153
        %vm2160 = vmor %vm2158, %vm2159
        %v2161 = vsel %vm2160, %v2153, %v2157
        %v2162 = vand.u32 2147483647, %v1978
        %vm2163 = vcmp.eq.f32.partialorder %v2162, 8.507059e+37
        %v2164 = vand.u32 %v1978, 2147483648
        %v2165 = vor.u32 1.1754944e-38, %v2164
        %v2166 = vsel %vm2163, %v2165, %v2161
        %v2167 = vmul.f32 %v2105, %v2166
        %v2168 = vrcp.pop %v1979
        %v2169 = vmul.f32 %v1979, %v2168
        %v2170 = vsub.f32 1.0, %v2169
        %v2171 = vmul.f32 %v2168, %v2170
        %v2172 = vadd.f32 %v2168, %v2171
        %vm2173 = vweird.f32 %v1979
        %vm2174 = vweird.f32 %v2168
        %vm2175 = vmor %vm2173, %vm2174
        %v2176 = vsel %vm2175, %v2168, %v2172
        %v2177 = vand.u32 2147483647, %v1979
        %vm2178 = vcmp.eq.f32.partialorder %v2177, 8.507059e+37
        %v2179 = vand.u32 %v1979, 2147483648
        %v2180 = vor.u32 1.1754944e-38, %v2179
        %v2181 = vsel %vm2178, %v2180, %v2176
        %v2182 = vmul.f32 %v2106, %v2181
        %v2183 = vrcp.pop %v1980
        %v2184 = vmul.f32 %v1980, %v2183
        %v2185 = vsub.f32 1.0, %v2184
        %v2186 = vmul.f32 %v2183, %v2185
        %v2187 = vadd.f32 %v2183, %v2186
        %vm2188 = vweird.f32 %v1980
        %vm2189 = vweird.f32 %v2183
        %vm2190 = vmor %vm2188, %vm2189
        %v2191 = vsel %vm2190, %v2183, %v2187
        %v2192 = vand.u32 2147483647, %v1980
        %vm2193 = vcmp.eq.f32.partialorder %v2192, 8.507059e+37
        %v2194 = vand.u32 %v1980, 2147483648
        %v2195 = vor.u32 1.1754944e-38, %v2194
        %v2196 = vsel %vm2193, %v2195, %v2191
        %v2197 = vmul.f32 %v2107, %v2196
        %v2198 = vpack.c.bf16 %v2122, %v2122
        %v2199 = vpack.c.bf16 %v2137, %v2137
        %v2200 = vpack.c.bf16 %v2152, %v2152
        %v2201 = vpack.c.bf16 %v2167, %v2167
        %v2202 = vpack.c.bf16 %v2182, %v2182
        %v2203 = vpack.c.bf16 %v2197, %v2197
        %v2204 = vld [vmem:[%s11] sm:$0xf]
        %s2205 = scalar_lea.vmem %s11, 4
        %v2206 = vld [vmem:[%s2205] sm:$0xf]
        %v2208 = vsel %vm1782, %v2199, 0
        %v2211 = vsel %vm1990, %v2206, 0
        %2213 = vmatpush.bf16.msra.mxu0 0
        %2214 = vmatpush.bf16.msra.mxu0 0
        %2215 = vmatpush.bf16.msra.mxu0 0
        %2216 = vmatpush.bf16.msra.mxu0 0
        %2217 = vmatpush.bf16.msra.mxu0 0
        %2218 = vmatpush.bf16.msra.mxu0 0
        %2219 = vmatpush.bf16.msra.mxu0 0
        %2220 = vmatpush.bf16.msra.mxu0 %v2211
        %2221 = vmatmul.bf16.gmra.mxu0 %v2208
        %v2222 = vpop.f32.mrf.mxu0
        %v2223 = vadd.f32 0.0, %v2222
        %v2224 = vpop.f32.mrf.mxu0
        %2225 = vdwg.mxu0
        %v2227 = vsel %vm1782, %v2198, 0
        %v2230 = vsel %vm1990, %v2204, 0
        %2232 = vmatpush.bf16.msra.mxu0 0
        %2233 = vmatpush.bf16.msra.mxu0 0
        %2234 = vmatpush.bf16.msra.mxu0 0
        %2235 = vmatpush.bf16.msra.mxu0 0
        %2236 = vmatpush.bf16.msra.mxu0 0
        %2237 = vmatpush.bf16.msra.mxu0 0
        %2238 = vmatpush.bf16.msra.mxu0 0
        %2239 = vmatpush.bf16.msra.mxu0 %v2230
        %2240 = vmatmul.bf16.gmra.mxu0 %v2227
        %v2241 = vpop.f32.mrf.mxu0
        %v2242 = vadd.f32 %v2223, %v2241
        %v2243 = vpop.f32.mrf.mxu0
        %2244 = vdwg.mxu0
        %s2245 = scalar_lea.vmem %s11, 8
        %v2246 = vld [vmem:[%s2245] sm:$0xf]
        %v2248 = vsel %vm1782, %v2200, 0
        %v2251 = vsel %vm1990, %v2246, 0
        %2253 = vmatpush.bf16.msra.mxu0 0
        %2254 = vmatpush.bf16.msra.mxu0 0
        %2255 = vmatpush.bf16.msra.mxu0 0
        %2256 = vmatpush.bf16.msra.mxu0 0
        %2257 = vmatpush.bf16.msra.mxu0 0
        %2258 = vmatpush.bf16.msra.mxu0 0
        %2259 = vmatpush.bf16.msra.mxu0 0
        %2260 = vmatpush.bf16.msra.mxu0 %v2251
        %2261 = vmatmul.bf16.gmra.mxu0 %v2248
        %v2262 = vpop.f32.mrf.mxu0
        %v2263 = vadd.f32 0.0, %v2262
        %v2264 = vpop.f32.mrf.mxu0
        %2265 = vdwg.mxu0
        %v2266 = vadd.f32 %v2242, %v2263
        %s2267 = scalar_lea.vmem %s11, 12
        %v2268 = vld [vmem:[%s2267] sm:$0xf]
        %v2270 = vsel %vm1782, %v2201, 0
        %v2273 = vsel %vm1990, %v2268, 0
        %2275 = vmatpush.bf16.msra.mxu0 0
        %2276 = vmatpush.bf16.msra.mxu0 0
        %2277 = vmatpush.bf16.msra.mxu0 0
        %2278 = vmatpush.bf16.msra.mxu0 0
        %2279 = vmatpush.bf16.msra.mxu0 0
        %2280 = vmatpush.bf16.msra.mxu0 0
        %2281 = vmatpush.bf16.msra.mxu0 0
        %2282 = vmatpush.bf16.msra.mxu0 %v2273
        %2283 = vmatmul.bf16.gmra.mxu0 %v2270
        %v2284 = vpop.f32.mrf.mxu0
        %v2285 = vadd.f32 0.0, %v2284
        %v2286 = vpop.f32.mrf.mxu0
        %2287 = vdwg.mxu0
        %v2288 = vadd.f32 %v2266, %v2285
        %s2289 = scalar_lea.vmem %s11, 16
        %v2290 = vld [vmem:[%s2289] sm:$0xf]
        %v2292 = vsel %vm1782, %v2202, 0
        %v2295 = vsel %vm1990, %v2290, 0
        %2297 = vmatpush.bf16.msra.mxu0 0
        %2298 = vmatpush.bf16.msra.mxu0 0
        %2299 = vmatpush.bf16.msra.mxu0 0
        %2300 = vmatpush.bf16.msra.mxu0 0
        %2301 = vmatpush.bf16.msra.mxu0 0
        %2302 = vmatpush.bf16.msra.mxu0 0
        %2303 = vmatpush.bf16.msra.mxu0 0
        %2304 = vmatpush.bf16.msra.mxu0 %v2295
        %2305 = vmatmul.bf16.gmra.mxu0 %v2292
        %v2306 = vpop.f32.mrf.mxu0
        %v2307 = vadd.f32 0.0, %v2306
        %v2308 = vpop.f32.mrf.mxu0
        %2309 = vdwg.mxu0
        %v2310 = vadd.f32 %v2288, %v2307
        %s2311 = scalar_lea.vmem %s11, 20
        %v2312 = vld [vmem:[%s2311] sm:$0xf]
        %v2314 = vsel %vm1782, %v2203, 0
        %v2317 = vsel %vm1990, %v2312, 0
        %2319 = vmatpush.bf16.msra.mxu0 0
        %2320 = vmatpush.bf16.msra.mxu0 0
        %2321 = vmatpush.bf16.msra.mxu0 0
        %2322 = vmatpush.bf16.msra.mxu0 0
        %2323 = vmatpush.bf16.msra.mxu0 0
        %2324 = vmatpush.bf16.msra.mxu0 0
        %2325 = vmatpush.bf16.msra.mxu0 0
        %2326 = vmatpush.bf16.msra.mxu0 %v2317
        %2327 = vmatmul.bf16.gmra.mxu0 %v2314
        %v2328 = vpop.f32.mrf.mxu0
        %v2329 = vadd.f32 0.0, %v2328
        %v2330 = vpop.f32.mrf.mxu0
        %2331 = vdwg.mxu0
        %v2332 = vadd.f32 %v2310, %v2329
        %v2333 = vld [vmem:[%s12] sm:$0x1]
        %v2335 = vperm.slane %v2333, 0
        %v2337 = vadd.f32 %v2332, %v2335
        %v2338 = vadd.f32 %v1352, %v2337
        %v2339 = vld [vmem:[%s4] sm:$0x1]
        %v2340 = vmul.f32 %v2338, %v2338
        %2341 = vadd.xlane.f32.xlu0 %v2340
        %v2342 = vpop.xlane.xlu0 %2341
        %v2343 = vmul.f32 %v2342, 0.020833334
        %v2344 = vadd.f32 %v2343, 1e-06
        %v2345 = vrsqrt.pop %v2344
        %v2346 = vmul.f32 %v2345, %v2344
        %v2347 = vmul.f32 %v2346, %v2345
        %v2348 = vmul.f32 0.5, %v2347
        %v2349 = vsub.f32 1.5, %v2348
        %v2350 = vmul.f32 %v2345, %v2349
        %vm2351 = vweird.f32 %v2344
        %vm2352 = vweird.f32 %v2345
        %vm2353 = vmor %vm2351, %vm2352
        %v2354 = vsel %vm2353, %v2345, %v2350
        %v2355 = vmul.f32 %v2338, %v2354
        %v2357 = vperm.slane %v2339, 0
        %v2359 = vmul.f32 %v2355, %v2357
        %v2360 = vpack.c.bf16 %v2359, %v2359
        %v2361 = vld [vmem:[%s13] sm:$0xff]
        %v2362 = vld [vmem:[%s13 + $0x8] sm:$0xff]
        %v2363 = vld [vmem:[%s13 + $0x10] sm:$0xff]
        %v2364 = vld [vmem:[%s13 + $0x18] sm:$0xff]
        %v2365 = vld [vmem:[%s13 + $0x20] sm:$0xff]
        %v2366 = vld [vmem:[%s13 + $0x28] sm:$0xff]
        %v2367 = vld [vmem:[%s13 + $0x30] sm:$0xff]
        %v2368 = vld [vmem:[%s13 + $0x38] sm:$0xff]
        %v2369 = vld [vmem:[%s13 + $0x40] sm:$0xff]
        %v2370 = vld [vmem:[%s13 + $0x48] sm:$0xff]
        %v2371 = vld [vmem:[%s13 + $0x50] sm:$0xff]
        %v2372 = vld [vmem:[%s13 + $0x58] sm:$0xff]
        %v2373 = vld [vmem:[%s13 + $0x60] sm:$0xff]
        %v2374 = vld [vmem:[%s13 + $0x68] sm:$0xff]
        %v2375 = vld [vmem:[%s13 + $0x70] sm:$0xff]
        %v2376 = vld [vmem:[%s13 + $0x78] sm:$0xff]
        %v2377 = vld [vmem:[%s14] sm:$0x3]
        %v2379 = vperm.slane %v2377, 0
        %v2380 = vperm.slane %v2377, 1
        %v2399 = vunpack.c.l.b16 %v2361
        %v2400 = vunpack.c.h.b16 %v2361
        %v2401 = vunpack.c.l.b16 %v2362
        %v2402 = vunpack.c.h.b16 %v2362
        %v2403 = vunpack.c.l.b16 %v2363
        %v2404 = vunpack.c.h.b16 %v2363
        %v2405 = vunpack.c.l.b16 %v2364
        %v2406 = vunpack.c.h.b16 %v2364
        %v2407 = vunpack.c.l.b16 %v2365
        %v2408 = vunpack.c.h.b16 %v2365
        %v2409 = vunpack.c.l.b16 %v2366
        %v2410 = vunpack.c.h.b16 %v2366
        %v2411 = vunpack.c.l.b16 %v2367
        %v2412 = vunpack.c.h.b16 %v2367
        %v2413 = vunpack.c.l.b16 %v2368
        %v2414 = vunpack.c.h.b16 %v2368
        %v2415 = vunpack.c.l.b16 %v2369
        %v2416 = vunpack.c.h.b16 %v2369
        %v2417 = vunpack.c.l.b16 %v2370
        %v2418 = vunpack.c.h.b16 %v2370
        %v2419 = vunpack.c.l.b16 %v2371
        %v2420 = vunpack.c.h.b16 %v2371
        %v2421 = vunpack.c.l.b16 %v2372
        %v2422 = vunpack.c.h.b16 %v2372
        %v2423 = vunpack.c.l.b16 %v2373
        %v2424 = vunpack.c.h.b16 %v2373
        %v2425 = vunpack.c.l.b16 %v2374
        %v2426 = vunpack.c.h.b16 %v2374
        %v2427 = vunpack.c.l.b16 %v2375
        %v2428 = vunpack.c.h.b16 %v2375
        %v2429 = vunpack.c.l.b16 %v2376
        %v2430 = vunpack.c.h.b16 %v2376
        %v2431 = vpack.c.b16 %v2401, %v2399
        %v2432 = vpack.c.b16 %v2402, %v2400
        %v2433 = vpack.c.b16 %v2405, %v2403
        %v2434 = vpack.c.b16 %v2406, %v2404
        %v2435 = vpack.c.b16 %v2409, %v2407
        %v2436 = vpack.c.b16 %v2410, %v2408
        %v2437 = vpack.c.b16 %v2413, %v2411
        %v2438 = vpack.c.b16 %v2414, %v2412
        %v2439 = vpack.c.b16 %v2417, %v2415
        %v2440 = vpack.c.b16 %v2418, %v2416
        %v2441 = vpack.c.b16 %v2421, %v2419
        %v2442 = vpack.c.b16 %v2422, %v2420
        %v2443 = vpack.c.b16 %v2425, %v2423
        %v2444 = vpack.c.b16 %v2426, %v2424
        %v2445 = vpack.c.b16 %v2429, %v2427
        %v2446 = vpack.c.b16 %v2430, %v2428
        %2463 = vmatpush.bf16.msra.mxu0 %v2445
        %2464 = vmatpush.bf16.msra.mxu0 %v2443
        %2465 = vmatpush.bf16.msra.mxu0 %v2441
        %2466 = vmatpush.bf16.msra.mxu0 %v2439
        %2467 = vmatpush.bf16.msra.mxu0 %v2437
        %2468 = vmatpush.bf16.msra.mxu0 %v2435
        %2469 = vmatpush.bf16.msra.mxu0 %v2433
        %2470 = vmatpush.bf16.msra.mxu0 %v2431
        %2471 = vmatmul.bf16.gmra.mxu0 %v2360
        %v2472 = vpop.f32.mrf.mxu0
        %v2473 = vadd.f32 %v2379, %v2472
        %v2474 = vpop.f32.mrf.mxu0
        %2475 = vdwg.mxu0
        %2476 = vmatpush.bf16.msra.mxu0 %v2446
        %2477 = vmatpush.bf16.msra.mxu0 %v2444
        %2478 = vmatpush.bf16.msra.mxu0 %v2442
        %2479 = vmatpush.bf16.msra.mxu0 %v2440
        %2480 = vmatpush.bf16.msra.mxu0 %v2438
        %2481 = vmatpush.bf16.msra.mxu0 %v2436
        %2482 = vmatpush.bf16.msra.mxu0 %v2434
        %2483 = vmatpush.bf16.msra.mxu0 %v2432
        %2484 = vmatmul.bf16.gmra.mxu0 %v2360
        %v2485 = vpop.f32.mrf.mxu0
        %v2486 = vadd.f32 %v2380, %v2485
        %v2487 = vpop.f32.mrf.mxu0
        %2488 = vdwg.mxu0
        %v2489 = vxor.u32 %v2473, 2147483648
        %v2490 = vmul.f32 %v2489, 1.442695
        %v2491 = vpow.pop %v2490
        %v2492 = vadd.f32 %v2491, 1.0
        %v2493 = vrcp.pop %v2492
        %v2494 = vmul.f32 %v2492, %v2493
        %v2495 = vsub.f32 1.0, %v2494
        %v2496 = vmul.f32 %v2493, %v2495
        %v2497 = vadd.f32 %v2493, %v2496
        %vm2498 = vweird.f32 %v2492
        %vm2499 = vweird.f32 %v2493
        %vm2500 = vmor %vm2498, %vm2499
        %v2501 = vsel %vm2500, %v2493, %v2497
        %v2502 = vand.u32 2147483647, %v2492
        %vm2503 = vcmp.eq.f32.partialorder %v2502, 8.507059e+37
        %v2504 = vand.u32 %v2492, 2147483648
        %v2505 = vor.u32 1.1754944e-38, %v2504
        %v2506 = vsel %vm2503, %v2505, %v2501
        %v2507 = vmul.f32 1.0, %v2506
        %v2508 = vmul.f32 %v2473, %v2507
        %v2509 = vmul.f32 %v2508, %v2486
        %v2510 = vpack.c.bf16 %v2509, %v2509
        %v2511 = vld [vmem:[%s15] sm:$0xf]
        %v2512 = vld [vmem:[%s15 + $0x4] sm:$0xf]
        %v2513 = vld [vmem:[%s15 + $0x8] sm:$0xf]
        %v2514 = vld [vmem:[%s15 + $0xc] sm:$0xf]
        %v2515 = vld [vmem:[%s15 + $0x10] sm:$0xf]
        %v2516 = vld [vmem:[%s15 + $0x14] sm:$0xf]
        %v2517 = vld [vmem:[%s15 + $0x18] sm:$0xf]
        %v2518 = vld [vmem:[%s15 + $0x1c] sm:$0xf]
        %v2519 = vld [vmem:[%s15 + $0x20] sm:$0xf]
        %v2520 = vld [vmem:[%s15 + $0x24] sm:$0xf]
        %v2521 = vld [vmem:[%s15 + $0x28] sm:$0xf]
        %v2522 = vld [vmem:[%s15 + $0x2c] sm:$0xf]
        %v2523 = vld [vmem:[%s15 + $0x30] sm:$0xf]
        %v2524 = vld [vmem:[%s15 + $0x34] sm:$0xf]
        %v2525 = vld [vmem:[%s15 + $0x38] sm:$0xf]
        %v2526 = vld [vmem:[%s15 + $0x3c] sm:$0xf]
        %v2527 = vld [vmem:[%s16] sm:$0x1]
        %v2529 = vperm.slane %v2527, 0
        %v2547 = vunpack.c.l.b16 %v2511
        %v2548 = vunpack.c.l.b16 %v2512
        %v2549 = vunpack.c.l.b16 %v2513
        %v2550 = vunpack.c.l.b16 %v2514
        %v2551 = vunpack.c.l.b16 %v2515
        %v2552 = vunpack.c.l.b16 %v2516
        %v2553 = vunpack.c.l.b16 %v2517
        %v2554 = vunpack.c.l.b16 %v2518
        %v2555 = vunpack.c.l.b16 %v2519
        %v2556 = vunpack.c.l.b16 %v2520
        %v2557 = vunpack.c.l.b16 %v2521
        %v2558 = vunpack.c.l.b16 %v2522
        %v2559 = vunpack.c.l.b16 %v2523
        %v2560 = vunpack.c.l.b16 %v2524
        %v2561 = vunpack.c.l.b16 %v2525
        %v2562 = vunpack.c.l.b16 %v2526
        %v2563 = vpack.c.b16 %v2548, %v2547
        %v2564 = vpack.c.b16 %v2550, %v2549
        %v2565 = vpack.c.b16 %v2552, %v2551
        %v2566 = vpack.c.b16 %v2554, %v2553
        %v2567 = vpack.c.b16 %v2556, %v2555
        %v2568 = vpack.c.b16 %v2558, %v2557
        %v2569 = vpack.c.b16 %v2560, %v2559
        %v2570 = vpack.c.b16 %v2562, %v2561
        %2579 = vmatpush.bf16.msra.mxu0 %v2570
        %2580 = vmatpush.bf16.msra.mxu0 %v2569
        %2581 = vmatpush.bf16.msra.mxu0 %v2568
        %2582 = vmatpush.bf16.msra.mxu0 %v2567
        %2583 = vmatpush.bf16.msra.mxu0 %v2566
        %2584 = vmatpush.bf16.msra.mxu0 %v2565
        %2585 = vmatpush.bf16.msra.mxu0 %v2564
        %2586 = vmatpush.bf16.msra.mxu0 %v2563
        %2587 = vmatmul.bf16.gmra.mxu0 %v2510
        %v2588 = vpop.f32.mrf.mxu0
        %v2589 = vadd.f32 %v2529, %v2588
        %v2590 = vpop.f32.mrf.mxu0
        %2591 = vdwg.mxu0
        %v2592 = vadd.f32 %v2338, %v2589
        %2593 = vst [vmem:[%s608] sm:$0xff] %v2592
        %s2594 = sand.u32 %s419, 1
        %s2595 = scalar_lea.sflag [#allocation6], %s2594
        %s2596 = sand.u32 %s419, 1
        %s2597 = smul.addr %s2596, 8
        %s2598 = scalar_lea.vmem [#allocation10], %s2597
        // Predicated region
        $region105: #{tpu_custom_call.1} parent=87 // pred_check
          %p2599 = pneg %p429
        $region106: #{tpu_custom_call.1} parent=87 // pred_check_branch
          %2601 = sbr.rel (%p2599) target = $region108
        $region107: #{tpu_custom_call.1} parent=87 // pred_region
          %2603 = vsyncadd %s2595, 0
          %s2604 = sadd.s32 %s40, %s39
          %s2605 = smul.addr %s2604, 8
          %s2606 = scalar_lea.hbm %s17, %s2605
          %s2608 = sshll.u32 %s2598, 4
          %s2609 = int_to_ptr.vmem [resolvable:$true] %s2608
          %s2610 = sshll.u32 %s2606, 4
          %s2611 = int_to_ptr.hbm [resolvable:$true] %s2610
          %2613 = dma.vmem_to_hbm [thread:$0]  %s2609, 128, %s2611, %s2595
        $region108: #{tpu_custom_call.1} parent=87 // pred_fallthru
          _
      $region88: #{tpu_custom_call.1} parent=5 // pred_fallthru
        _
      %p2614 = scmp.le.s32.totalorder 2, %s30
      // Predicated region
      $region109: #{tpu_custom_call.1} parent=5 // pred_check
        %p2615 = pneg %p2614
      $region110: #{tpu_custom_call.1} parent=5 // pred_check_branch
        %2617 = sbr.rel (%p2615) target = $region112
      $region111: #{tpu_custom_call.1} parent=5 // pred_region
        %s2618 = ssub.s32 %s30, 2
        // Predicated region
        $region113: #{tpu_custom_call.1} parent=111 // pred_check
          %p2619 = pneg %p435
        $region114: #{tpu_custom_call.1} parent=111 // pred_check_branch
          %2621 = sbr.rel (%p2619) target = $region116
        $region115: #{tpu_custom_call.1} parent=111 // pred_region
          %s2622 = sand.u32 %s420, 1
          %s2623 = scalar_lea.sflag [#allocation6], %s2622
          %s2624 = sand.u32 %s420, 1
          %s2625 = smul.addr %s2624, 8
          %s2626 = scalar_lea.vmem [#allocation10], %s2625
          %2628 = dma.done %s2623, 128
        $region116: #{tpu_custom_call.1} parent=111 // pred_fallthru
          _
      $region112: #{tpu_custom_call.1} parent=5 // pred_fallthru
        _
    $region6: #{tpu_custom_call.1} parent=1 // loop_footer
      %s34 = sadd.s32 1, %s30
    $region7: #{tpu_custom_call.1} parent=1 // loop_footer_branch
      %29 = sbr.rel target = $region3
    $region8: #{tpu_custom_call.1} parent=1 // loop_exit
      _
    %2629 = vsyncpa [#allocation5], 1
    %s2630 = scalar_lea.sflag [#allocation5], 1
    %2631 = vsyncpa %s2630, 1
    %2632 = vsyncpa [#allocation8], 1
    %2633 = vsyncpa [#allocation6], 1
    %s2634 = scalar_lea.sflag [#allocation6], 1
    %2635 = vsyncpa %s2634, 1

</llo_original>
